<compile_context>
chip_gen: v6e
topology: v6e:2x2x1
jax: 0.10.0
libtpu: 0.0.40
codegen_flags: <defaults>
</compile_context>

<pallas_src>
import functools

import jax
import jax.numpy as jnp
from jax import lax
from jax.experimental import pallas as pl
from jax.experimental.pallas import tpu as pltpu


def _gat_attention(Wh, a1_bcast, a2_bcast, adj, alpha):
    """Single-head GAT attention + ELU for one batch element (stays in VMEM).

    Wh:       (V, E)  projected features
    a1_bcast: (E, V)  a[:E] broadcast along columns -> Wh @ a1_bcast gives s1[i]
    a2_bcast: (V, E)  a[E:] broadcast along rows    -> contract w/ Wh gives s2[j]
    adj:      (V, V)  normalised adjacency D^-1/2 (B+I)_minmax D^-1/2
    """
    # e[i, j] = a1 . Wh_i + a2 . Wh_j  -- built from two small MXU pushes,
    # no VPU reduce and no in-kernel transposes.
    e = jnp.dot(Wh, a1_bcast, preferred_element_type=jnp.float32)            # s1[i] over (V, V)
    e = e + lax.dot_general(a2_bcast, Wh, (((1,), (1,)), ((), ())),
                            preferred_element_type=jnp.float32)              # + s2[j]
    e = jnp.where(e > 0, e, alpha * e)                                       # LeakyReLU(alpha)
    # Numerically-stable softmax over j; exact divide for torch parity.
    e = e - jnp.max(e, axis=-1, keepdims=True)
    p = jnp.exp(e)
    attn = p / jnp.sum(p, axis=-1, keepdims=True)
    attn = jnp.dot(adj, attn, preferred_element_type=jnp.float32)            # adj_norm @ attn
    hp = jnp.dot(attn, Wh, preferred_element_type=jnp.float32)               # (V, E)
    # ELU(alpha=1); clamp before exp so the EUP never sees large positives.
    return jnp.where(hp > 0, hp, jnp.exp(jnp.minimum(hp, 0.0)) - 1.0)


def fused_gat_kernel(x_ref, w1_ref, a11_ref, a21_ref, adj1_ref,
                     w2_ref, a12_ref, a22_ref, adj2_ref, o_ref,
                     *, alpha, bblk, n_vertices):
    V = n_vertices
    a11 = a11_ref[...]; a21 = a21_ref[...]; adj1 = adj1_ref[...]
    a12 = a12_ref[...]; a22 = a22_ref[...]; adj2 = adj2_ref[...]

    # Layer 1 projection: single MXU push over the whole (bblk*V, F) batch block.
    Wh1_all = jnp.dot(x_ref[...], w1_ref[...], preferred_element_type=jnp.float32)

    h1_blocks = []
    for b in range(bblk):                       # tiny, fully unrolled at trace time
        Wh1 = Wh1_all[b * V:(b + 1) * V, :]
        h1_blocks.append(_gat_attention(Wh1, a11, a21, adj1, alpha))
    h1_all = h1_blocks[0] if bblk == 1 else jnp.concatenate(h1_blocks, axis=0)

    # Layer 2 projection: again one batched MXU push; h1 never leaves VMEM.
    Wh2_all = jnp.dot(h1_all, w2_ref[...], preferred_element_type=jnp.float32)

    for b in range(bblk):
        Wh2 = Wh2_all[b * V:(b + 1) * V, :]
        h2 = _gat_attention(Wh2, a12, a22, adj2, alpha)
        o_ref[b * V:(b + 1) * V, :] = jnp.tanh(h2).astype(o_ref.dtype)


def compute_adj_norm(Bp):
    """Tiny parameter-only preprocessing: (B + I) min/max-normalised, then
    D^-1/2 A D^-1/2 (via rsqrt of the degree vector -- no matrix inverse)."""
    V = Bp.shape[0]
    adj = Bp + jnp.eye(V, dtype=Bp.dtype)
    amin = jnp.min(adj)
    amax = jnp.max(adj)
    adj = (adj - amin) / (amax - amin)
    d12 = lax.rsqrt(jnp.sum(adj, axis=1))
    return adj * d12[:, None] * d12[None, :]


def pack_attention_vec(a, n_vertices):
    """Split the (2E,1) attention vector and pre-broadcast it so both logit
    terms become canonical MXU matmuls in-kernel (no reduce / transpose)."""
    E = a.shape[0] // 2
    a1 = a[:E, 0]
    a2 = a[E:, 0]
    a1_bcast = jnp.tile(a1[:, None], (1, n_vertices))     # (E, V)
    a2_bcast = jnp.tile(a2[None, :], (n_vertices, 1))     # (V, E)
    return a1_bcast, a2_bcast


def _tensorcores_per_chip():
    # v7x has 2 TensorCores per chip; v5e/v6e have 1.  Used only to pick the
    # batch block: one grid step on single-TC parts, one step per core on v7x.
    try:
        kind = jax.devices()[0].device_kind.lower()
    except Exception:
        return 1
    return 2 if "v7" in kind else 1


def baseline_forward(x, params, *, alpha=0.2):
    B_, H_, W_, T_, V_ = x.shape
    Fdim = H_ * W_ * T_

    # V<->F permute done in the wrapper (free at these sizes); the kernel sees
    # a lane-dense (B*V, F) slab and never transposes.
    x2d = jnp.transpose(x.reshape(B_, Fdim, V_), (0, 2, 1)).reshape(B_ * V_, Fdim)

    hid, outp = params["hidden"], params["output"]
    E1 = hid["W"].shape[1]
    E2 = outp["W"].shape[1]
    a11, a21 = pack_attention_vec(hid["a"], V_)
    a12, a22 = pack_attention_vec(outp["a"], V_)
    adj1 = compute_adj_norm(hid["B"])
    adj2 = compute_adj_norm(outp["B"])

    n_steps = _tensorcores_per_chip()
    if B_ % n_steps != 0:
        n_steps = 1
    bblk = B_ // n_steps
    rows = bblk * V_

    const = lambda b: (0, 0)
    kernel = functools.partial(fused_gat_kernel, alpha=alpha, bblk=bblk,
                               n_vertices=V_)
    out2d = pl.pallas_call(
        kernel,
        out_shape=jax.ShapeDtypeStruct((B_ * V_, E2), jnp.float32),
        grid_spec=pltpu.PrefetchScalarGridSpec(
            num_scalar_prefetch=0,
            grid=(n_steps,),
            in_specs=[
                pl.BlockSpec((rows, Fdim), lambda b: (b, 0)),   # x  (lane-dense rows)
                pl.BlockSpec((Fdim, E1), const),                # W        (hidden)
                pl.BlockSpec((E1, V_), const),                  # a[:E]*1^T (hidden)
                pl.BlockSpec((V_, E1), const),                  # 1*a[E:]^T (hidden)
                pl.BlockSpec((V_, V_), const),                  # adj_norm  (hidden)
                pl.BlockSpec((E1, E2), const),                  # W        (output)
                pl.BlockSpec((E2, V_), const),                  # a[:E]*1^T (output)
                pl.BlockSpec((V_, E2), const),                  # 1*a[E:]^T (output)
                pl.BlockSpec((V_, V_), const),                  # adj_norm  (output)
            ],
            out_specs=pl.BlockSpec((rows, E2), lambda b: (b, 0)),
        ),
        compiler_params=pltpu.CompilerParams(
            dimension_semantics=("parallel",)),   # one step per TensorCore on v7x
    )(x2d, hid["W"], a11, a21, adj1, outp["W"], a12, a22, adj2)

    # Same row-major reinterpretation as torch's .view(B, H, W, T, V) on the
    # (B, V, F)-contiguous GAT output (tanh is elementwise -> already applied).
    return out2d.reshape(B_, H_, W_, T_, V_)


def xavier_uniform(key, shape, gain=1.414):
    fan_out, fan_in = shape[0], shape[1]    # bound is symmetric in (fan_in, fan_out)
    bound = gain * (6.0 / (fan_in + fan_out)) ** 0.5
    return jax.random.uniform(key, shape, jnp.float32, -bound, bound)


def _reference_forward(x, params, *, alpha=0.2):
    """Pure-JAX reference mirroring the PyTorch BaselineModel forward."""
    hi = lax.Precision.HIGHEST

    def layer(h, W, a, Bp):
        Wh = jnp.matmul(h, W, precision=hi)                       # (B, V, E)
        E = W.shape[1]
        s1 = jnp.matmul(Wh, a[:E, 0], precision=hi)               # (B, V)
        s2 = jnp.matmul(Wh, a[E:, 0], precision=hi)               # (B, V)
        e = s1[:, :, None] + s2[:, None, :]
        e = jnp.where(e > 0, e, alpha * e)
        attn = jax.nn.softmax(e, axis=-1)
        adj = compute_adj_norm(Bp)
        attn = jnp.einsum("uv,bvw->buw", adj, attn, precision=hi)
        hp = jnp.einsum("buv,bve->bue", attn, Wh, precision=hi)
        return jnp.where(hp > 0, hp, jnp.exp(jnp.minimum(hp, 0.0)) - 1.0)

    B_, H_, W_, T_, V_ = x.shape
    h = jnp.transpose(x.reshape(B_, H_ * W_ * T_, V_), (0, 2, 1))
    h = layer(h, params["hidden"]["W"], params["hidden"]["a"], params["hidden"]["B"])
    h = layer(h, params["output"]["W"], params["output"]["a"], params["output"]["B"])
    return jnp.tanh(h.reshape(B_, H_, W_, T_, V_))


if __name__ == "__main__":
    key = jax.random.PRNGKey(0)
    B_, H_, W_, T_, V_ = 2, 4, 4, 4, 8              # F = H*W*T = 64
    Fdim = H_ * W_ * T_

    k = jax.random.split(key, 5)
    x = jax.random.normal(k[0], (B_, H_, W_, T_, V_), jnp.float32)

    params = {
        "hidden": {
            "W": xavier_uniform(k[1], (Fdim, Fdim)),
            "a": xavier_uniform(k[2], (2 * Fdim, 1)),
            "B": jnp.zeros((V_, V_), jnp.float32) + 1e-6,
        },
        "output": {
            "W": xavier_uniform(k[3], (Fdim, Fdim)),
            "a": xavier_uniform(k[4], (2 * Fdim, 1)),
            "B": jnp.zeros((V_, V_), jnp.float32) + 1e-6,
        },
    }

    out = baseline_forward(x, params)
    jax.block_until_ready(out)
    assert out.shape == (B_, H_, W_, T_, V_)
    assert bool(jnp.all(jnp.isfinite(out)))

    # Loose structural check against a pure-JAX reference (tolerance accounts
    # for MXU matmul pass differences; structural bugs produce O(1) errors).
    ref = _reference_forward(x, params)
    max_diff = float(jnp.max(jnp.abs(out - ref)))
    assert max_diff < 0.1, f"kernel/ref mismatch, max abs diff = {max_diff}"

    print("KERNEL_OK")
</pallas_src>

<mosaic_0001>
module attributes {stable_mosaic.version = 11 : i64} {
  func.func @fused_gat_kernel(%arg0: i32, %arg1: memref<16x64xf32, #tpu.memory_space<vmem>>, %arg2: memref<64x64xf32, #tpu.memory_space<vmem>>, %arg3: memref<64x8xf32, #tpu.memory_space<vmem>>, %arg4: memref<8x64xf32, #tpu.memory_space<vmem>>, %arg5: memref<8x8xf32, #tpu.memory_space<vmem>>, %arg6: memref<64x64xf32, #tpu.memory_space<vmem>>, %arg7: memref<64x8xf32, #tpu.memory_space<vmem>>, %arg8: memref<8x64xf32, #tpu.memory_space<vmem>>, %arg9: memref<8x8xf32, #tpu.memory_space<vmem>>, %arg10: memref<16x64xf32, #tpu.memory_space<vmem>>) attributes {dimension_semantics = [#tpu.dimension_semantics<parallel>], iteration_bounds = array<i64: 1>, scalar_prefetch = 0 : i64, scratch_operands = 0 : i64, tpu.core_type = #tpu.core_type<tc>, window_params = [{transform_indices = @transform_0, window_bounds = array<i64: 16, 64>}, {pipeline_mode = #tpu.pipeline_mode<synchronous>, transform_indices = @transform_1, window_bounds = array<i64: 64, 64>}, {pipeline_mode = #tpu.pipeline_mode<synchronous>, transform_indices = @transform_2, window_bounds = array<i64: 64, 8>}, {pipeline_mode = #tpu.pipeline_mode<synchronous>, transform_indices = @transform_3, window_bounds = array<i64: 8, 64>}, {pipeline_mode = #tpu.pipeline_mode<synchronous>, transform_indices = @transform_4, window_bounds = array<i64: 8, 8>}, {pipeline_mode = #tpu.pipeline_mode<synchronous>, transform_indices = @transform_5, window_bounds = array<i64: 64, 64>}, {pipeline_mode = #tpu.pipeline_mode<synchronous>, transform_indices = @transform_6, window_bounds = array<i64: 64, 8>}, {pipeline_mode = #tpu.pipeline_mode<synchronous>, transform_indices = @transform_7, window_bounds = array<i64: 8, 64>}, {pipeline_mode = #tpu.pipeline_mode<synchronous>, transform_indices = @transform_8, window_bounds = array<i64: 8, 8>}, {transform_indices = @transform_9, window_bounds = array<i64: 16, 64>}]} {
    %c0 = arith.constant 0 : index
    %c0_0 = arith.constant 0 : index
    %0 = vector.load %arg3[%c0, %c0_0] : memref<64x8xf32, #tpu.memory_space<vmem>>, vector<64x8xf32>
    %c0_1 = arith.constant 0 : index
    %c0_2 = arith.constant 0 : index
    %1 = vector.load %arg4[%c0_1, %c0_2] : memref<8x64xf32, #tpu.memory_space<vmem>>, vector<8x64xf32>
    %c0_3 = arith.constant 0 : index
    %c0_4 = arith.constant 0 : index
    %2 = vector.load %arg5[%c0_3, %c0_4] : memref<8x8xf32, #tpu.memory_space<vmem>>, vector<8x8xf32>
    %c0_5 = arith.constant 0 : index
    %c0_6 = arith.constant 0 : index
    %3 = vector.load %arg7[%c0_5, %c0_6] : memref<64x8xf32, #tpu.memory_space<vmem>>, vector<64x8xf32>
    %c0_7 = arith.constant 0 : index
    %c0_8 = arith.constant 0 : index
    %4 = vector.load %arg8[%c0_7, %c0_8] : memref<8x64xf32, #tpu.memory_space<vmem>>, vector<8x64xf32>
    %c0_9 = arith.constant 0 : index
    %c0_10 = arith.constant 0 : index
    %5 = vector.load %arg9[%c0_9, %c0_10] : memref<8x8xf32, #tpu.memory_space<vmem>>, vector<8x8xf32>
    %c0_11 = arith.constant 0 : index
    %c0_12 = arith.constant 0 : index
    %6 = vector.load %arg1[%c0_11, %c0_12] : memref<16x64xf32, #tpu.memory_space<vmem>>, vector<16x64xf32>
    %c0_13 = arith.constant 0 : index
    %c0_14 = arith.constant 0 : index
    %7 = vector.load %arg2[%c0_13, %c0_14] : memref<64x64xf32, #tpu.memory_space<vmem>>, vector<64x64xf32>
    %cst = arith.constant dense<0.000000e+00> : vector<16x64xf32>
    %8 = tpu.matmul %6, %7, %cst {dimension_numbers = #tpu.dot_dimension_numbers<[1], [0], [0], [1], [0, 0, 1, 1], [], []>} : vector<16x64xf32>, vector<64x64xf32>, vector<16x64xf32> -> vector<16x64xf32>
    %9 = vector.extract_strided_slice %8 {offsets = [0, 0], sizes = [8, 64], strides = [1, 1]} : vector<16x64xf32> to vector<8x64xf32>
    %cst_15 = arith.constant dense<0.000000e+00> : vector<8x8xf32>
    %10 = tpu.matmul %9, %0, %cst_15 {dimension_numbers = #tpu.dot_dimension_numbers<[1], [0], [0], [1], [0, 0, 1, 1], [], []>} : vector<8x64xf32>, vector<64x8xf32>, vector<8x8xf32> -> vector<8x8xf32>
    %cst_16 = arith.constant dense<0.000000e+00> : vector<8x8xf32>
    %11 = tpu.matmul %1, %9, %cst_16 {dimension_numbers = #tpu.dot_dimension_numbers<[1], [1], [0], [0], [0, 0, 1, 0], [], []>} : vector<8x64xf32>, vector<8x64xf32>, vector<8x8xf32> -> vector<8x8xf32>
    %12 = arith.addf %10, %11 : vector<8x8xf32>
    %cst_17 = arith.constant 0.000000e+00 : f32
    %13 = vector.broadcast %cst_17 : f32 to vector<8x8xf32>
    %14 = arith.cmpf ogt, %12, %13 : vector<8x8xf32>
    %cst_18 = arith.constant 2.000000e-01 : f32
    %15 = vector.broadcast %cst_18 : f32 to vector<8x8xf32>
    %16 = arith.mulf %15, %12 : vector<8x8xf32>
    %17 = arith.select %14, %12, %16 : vector<8x8xi1>, vector<8x8xf32>
    %cst_19 = arith.constant dense<0xFF800000> : vector<8xf32>
    %18 = vector.multi_reduction <maximumf>, %17, %cst_19 [1] : vector<8x8xf32> to vector<8xf32>
    %19 = vector.shape_cast %18 : vector<8xf32> to vector<8x1xf32>
    %20 = vector.broadcast %19 : vector<8x1xf32> to vector<8x8xf32>
    %21 = arith.subf %17, %20 : vector<8x8xf32>
    %22 = math.exp %21 : vector<8x8xf32>
    %cst_20 = arith.constant dense<0.000000e+00> : vector<8xf32>
    %23 = vector.multi_reduction <add>, %22, %cst_20 [1] : vector<8x8xf32> to vector<8xf32>
    %24 = vector.shape_cast %23 : vector<8xf32> to vector<8x1xf32>
    %25 = vector.broadcast %24 : vector<8x1xf32> to vector<8x8xf32>
    %26 = arith.divf %22, %25 : vector<8x8xf32>
    %cst_21 = arith.constant dense<0.000000e+00> : vector<8x8xf32>
    %27 = tpu.matmul %2, %26, %cst_21 {dimension_numbers = #tpu.dot_dimension_numbers<[1], [0], [0], [1], [0, 0, 1, 1], [], []>} : vector<8x8xf32>, vector<8x8xf32>, vector<8x8xf32> -> vector<8x8xf32>
    %cst_22 = arith.constant dense<0.000000e+00> : vector<8x64xf32>
    %28 = tpu.matmul %27, %9, %cst_22 {dimension_numbers = #tpu.dot_dimension_numbers<[1], [0], [0], [1], [0, 0, 1, 1], [], []>} : vector<8x8xf32>, vector<8x64xf32>, vector<8x64xf32> -> vector<8x64xf32>
    %cst_23 = arith.constant 0.000000e+00 : f32
    %29 = vector.broadcast %cst_23 : f32 to vector<8x64xf32>
    %30 = arith.cmpf ogt, %28, %29 : vector<8x64xf32>
    %cst_24 = arith.constant 0.000000e+00 : f32
    %31 = vector.broadcast %cst_24 : f32 to vector<8x64xf32>
    %32 = arith.minimumf %28, %31 : vector<8x64xf32>
    %33 = math.exp %32 : vector<8x64xf32>
    %cst_25 = arith.constant 1.000000e+00 : f32
    %34 = vector.broadcast %cst_25 : f32 to vector<8x64xf32>
    %35 = arith.subf %33, %34 : vector<8x64xf32>
    %36 = arith.select %30, %28, %35 : vector<8x64xi1>, vector<8x64xf32>
    %37 = vector.extract_strided_slice %8 {offsets = [8, 0], sizes = [8, 64], strides = [1, 1]} : vector<16x64xf32> to vector<8x64xf32>
    %cst_26 = arith.constant dense<0.000000e+00> : vector<8x8xf32>
    %38 = tpu.matmul %37, %0, %cst_26 {dimension_numbers = #tpu.dot_dimension_numbers<[1], [0], [0], [1], [0, 0, 1, 1], [], []>} : vector<8x64xf32>, vector<64x8xf32>, vector<8x8xf32> -> vector<8x8xf32>
    %cst_27 = arith.constant dense<0.000000e+00> : vector<8x8xf32>
    %39 = tpu.matmul %1, %37, %cst_27 {dimension_numbers = #tpu.dot_dimension_numbers<[1], [1], [0], [0], [0, 0, 1, 0], [], []>} : vector<8x64xf32>, vector<8x64xf32>, vector<8x8xf32> -> vector<8x8xf32>
    %40 = arith.addf %38, %39 : vector<8x8xf32>
    %cst_28 = arith.constant 0.000000e+00 : f32
    %41 = vector.broadcast %cst_28 : f32 to vector<8x8xf32>
    %42 = arith.cmpf ogt, %40, %41 : vector<8x8xf32>
    %cst_29 = arith.constant 2.000000e-01 : f32
    %43 = vector.broadcast %cst_29 : f32 to vector<8x8xf32>
    %44 = arith.mulf %43, %40 : vector<8x8xf32>
    %45 = arith.select %42, %40, %44 : vector<8x8xi1>, vector<8x8xf32>
    %cst_30 = arith.constant dense<0xFF800000> : vector<8xf32>
    %46 = vector.multi_reduction <maximumf>, %45, %cst_30 [1] : vector<8x8xf32> to vector<8xf32>
    %47 = vector.shape_cast %46 : vector<8xf32> to vector<8x1xf32>
    %48 = vector.broadcast %47 : vector<8x1xf32> to vector<8x8xf32>
    %49 = arith.subf %45, %48 : vector<8x8xf32>
    %50 = math.exp %49 : vector<8x8xf32>
    %cst_31 = arith.constant dense<0.000000e+00> : vector<8xf32>
    %51 = vector.multi_reduction <add>, %50, %cst_31 [1] : vector<8x8xf32> to vector<8xf32>
    %52 = vector.shape_cast %51 : vector<8xf32> to vector<8x1xf32>
    %53 = vector.broadcast %52 : vector<8x1xf32> to vector<8x8xf32>
    %54 = arith.divf %50, %53 : vector<8x8xf32>
    %cst_32 = arith.constant dense<0.000000e+00> : vector<8x8xf32>
    %55 = tpu.matmul %2, %54, %cst_32 {dimension_numbers = #tpu.dot_dimension_numbers<[1], [0], [0], [1], [0, 0, 1, 1], [], []>} : vector<8x8xf32>, vector<8x8xf32>, vector<8x8xf32> -> vector<8x8xf32>
    %cst_33 = arith.constant dense<0.000000e+00> : vector<8x64xf32>
    %56 = tpu.matmul %55, %37, %cst_33 {dimension_numbers = #tpu.dot_dimension_numbers<[1], [0], [0], [1], [0, 0, 1, 1], [], []>} : vector<8x8xf32>, vector<8x64xf32>, vector<8x64xf32> -> vector<8x64xf32>
    %cst_34 = arith.constant 0.000000e+00 : f32
    %57 = vector.broadcast %cst_34 : f32 to vector<8x64xf32>
    %58 = arith.cmpf ogt, %56, %57 : vector<8x64xf32>
    %cst_35 = arith.constant 0.000000e+00 : f32
    %59 = vector.broadcast %cst_35 : f32 to vector<8x64xf32>
    %60 = arith.minimumf %56, %59 : vector<8x64xf32>
    %61 = math.exp %60 : vector<8x64xf32>
    %cst_36 = arith.constant 1.000000e+00 : f32
    %62 = vector.broadcast %cst_36 : f32 to vector<8x64xf32>
    %63 = arith.subf %61, %62 : vector<8x64xf32>
    %64 = arith.select %58, %56, %63 : vector<8x64xi1>, vector<8x64xf32>
    %65 = tpu.concatenate %36, %64 in 0 : vector<8x64xf32>, vector<8x64xf32> -> vector<16x64xf32>
    %c0_37 = arith.constant 0 : index
    %c0_38 = arith.constant 0 : index
    %66 = vector.load %arg6[%c0_37, %c0_38] : memref<64x64xf32, #tpu.memory_space<vmem>>, vector<64x64xf32>
    %cst_39 = arith.constant dense<0.000000e+00> : vector<16x64xf32>
    %67 = tpu.matmul %65, %66, %cst_39 {dimension_numbers = #tpu.dot_dimension_numbers<[1], [0], [0], [1], [0, 0, 1, 1], [], []>} : vector<16x64xf32>, vector<64x64xf32>, vector<16x64xf32> -> vector<16x64xf32>
    %68 = vector.extract_strided_slice %67 {offsets = [0, 0], sizes = [8, 64], strides = [1, 1]} : vector<16x64xf32> to vector<8x64xf32>
    %cst_40 = arith.constant dense<0.000000e+00> : vector<8x8xf32>
    %69 = tpu.matmul %68, %3, %cst_40 {dimension_numbers = #tpu.dot_dimension_numbers<[1], [0], [0], [1], [0, 0, 1, 1], [], []>} : vector<8x64xf32>, vector<64x8xf32>, vector<8x8xf32> -> vector<8x8xf32>
    %cst_41 = arith.constant dense<0.000000e+00> : vector<8x8xf32>
    %70 = tpu.matmul %4, %68, %cst_41 {dimension_numbers = #tpu.dot_dimension_numbers<[1], [1], [0], [0], [0, 0, 1, 0], [], []>} : vector<8x64xf32>, vector<8x64xf32>, vector<8x8xf32> -> vector<8x8xf32>
    %71 = arith.addf %69, %70 : vector<8x8xf32>
    %cst_42 = arith.constant 0.000000e+00 : f32
    %72 = vector.broadcast %cst_42 : f32 to vector<8x8xf32>
    %73 = arith.cmpf ogt, %71, %72 : vector<8x8xf32>
    %cst_43 = arith.constant 2.000000e-01 : f32
    %74 = vector.broadcast %cst_43 : f32 to vector<8x8xf32>
    %75 = arith.mulf %74, %71 : vector<8x8xf32>
    %76 = arith.select %73, %71, %75 : vector<8x8xi1>, vector<8x8xf32>
    %cst_44 = arith.constant dense<0xFF800000> : vector<8xf32>
    %77 = vector.multi_reduction <maximumf>, %76, %cst_44 [1] : vector<8x8xf32> to vector<8xf32>
    %78 = vector.shape_cast %77 : vector<8xf32> to vector<8x1xf32>
    %79 = vector.broadcast %78 : vector<8x1xf32> to vector<8x8xf32>
    %80 = arith.subf %76, %79 : vector<8x8xf32>
    %81 = math.exp %80 : vector<8x8xf32>
    %cst_45 = arith.constant dense<0.000000e+00> : vector<8xf32>
    %82 = vector.multi_reduction <add>, %81, %cst_45 [1] : vector<8x8xf32> to vector<8xf32>
    %83 = vector.shape_cast %82 : vector<8xf32> to vector<8x1xf32>
    %84 = vector.broadcast %83 : vector<8x1xf32> to vector<8x8xf32>
    %85 = arith.divf %81, %84 : vector<8x8xf32>
    %cst_46 = arith.constant dense<0.000000e+00> : vector<8x8xf32>
    %86 = tpu.matmul %5, %85, %cst_46 {dimension_numbers = #tpu.dot_dimension_numbers<[1], [0], [0], [1], [0, 0, 1, 1], [], []>} : vector<8x8xf32>, vector<8x8xf32>, vector<8x8xf32> -> vector<8x8xf32>
    %cst_47 = arith.constant dense<0.000000e+00> : vector<8x64xf32>
    %87 = tpu.matmul %86, %68, %cst_47 {dimension_numbers = #tpu.dot_dimension_numbers<[1], [0], [0], [1], [0, 0, 1, 1], [], []>} : vector<8x8xf32>, vector<8x64xf32>, vector<8x64xf32> -> vector<8x64xf32>
    %cst_48 = arith.constant 0.000000e+00 : f32
    %88 = vector.broadcast %cst_48 : f32 to vector<8x64xf32>
    %89 = arith.cmpf ogt, %87, %88 : vector<8x64xf32>
    %cst_49 = arith.constant 0.000000e+00 : f32
    %90 = vector.broadcast %cst_49 : f32 to vector<8x64xf32>
    %91 = arith.minimumf %87, %90 : vector<8x64xf32>
    %92 = math.exp %91 : vector<8x64xf32>
    %cst_50 = arith.constant 1.000000e+00 : f32
    %93 = vector.broadcast %cst_50 : f32 to vector<8x64xf32>
    %94 = arith.subf %92, %93 : vector<8x64xf32>
    %95 = arith.select %89, %87, %94 : vector<8x64xi1>, vector<8x64xf32>
    %96 = math.tanh %95 : vector<8x64xf32>
    %c0_51 = arith.constant 0 : index
    %c0_52 = arith.constant 0 : index
    %97 = vector.load %arg10[%c0_51, %c0_52] : memref<16x64xf32, #tpu.memory_space<vmem>>, vector<8x64xf32>
    tpu.vector_store %arg10[%c0_51, %c0_52], %96 {strides = array<i32>} : memref<16x64xf32, #tpu.memory_space<vmem>>, vector<8x64xf32>,
    %98 = vector.extract_strided_slice %67 {offsets = [8, 0], sizes = [8, 64], strides = [1, 1]} : vector<16x64xf32> to vector<8x64xf32>
    %cst_53 = arith.constant dense<0.000000e+00> : vector<8x8xf32>
    %99 = tpu.matmul %98, %3, %cst_53 {dimension_numbers = #tpu.dot_dimension_numbers<[1], [0], [0], [1], [0, 0, 1, 1], [], []>} : vector<8x64xf32>, vector<64x8xf32>, vector<8x8xf32> -> vector<8x8xf32>
    %cst_54 = arith.constant dense<0.000000e+00> : vector<8x8xf32>
    %100 = tpu.matmul %4, %98, %cst_54 {dimension_numbers = #tpu.dot_dimension_numbers<[1], [1], [0], [0], [0, 0, 1, 0], [], []>} : vector<8x64xf32>, vector<8x64xf32>, vector<8x8xf32> -> vector<8x8xf32>
    %101 = arith.addf %99, %100 : vector<8x8xf32>
    %cst_55 = arith.constant 0.000000e+00 : f32
    %102 = vector.broadcast %cst_55 : f32 to vector<8x8xf32>
    %103 = arith.cmpf ogt, %101, %102 : vector<8x8xf32>
    %cst_56 = arith.constant 2.000000e-01 : f32
    %104 = vector.broadcast %cst_56 : f32 to vector<8x8xf32>
    %105 = arith.mulf %104, %101 : vector<8x8xf32>
    %106 = arith.select %103, %101, %105 : vector<8x8xi1>, vector<8x8xf32>
    %cst_57 = arith.constant dense<0xFF800000> : vector<8xf32>
    %107 = vector.multi_reduction <maximumf>, %106, %cst_57 [1] : vector<8x8xf32> to vector<8xf32>
    %108 = vector.shape_cast %107 : vector<8xf32> to vector<8x1xf32>
    %109 = vector.broadcast %108 : vector<8x1xf32> to vector<8x8xf32>
    %110 = arith.subf %106, %109 : vector<8x8xf32>
    %111 = math.exp %110 : vector<8x8xf32>
    %cst_58 = arith.constant dense<0.000000e+00> : vector<8xf32>
    %112 = vector.multi_reduction <add>, %111, %cst_58 [1] : vector<8x8xf32> to vector<8xf32>
    %113 = vector.shape_cast %112 : vector<8xf32> to vector<8x1xf32>
    %114 = vector.broadcast %113 : vector<8x1xf32> to vector<8x8xf32>
    %115 = arith.divf %111, %114 : vector<8x8xf32>
    %cst_59 = arith.constant dense<0.000000e+00> : vector<8x8xf32>
    %116 = tpu.matmul %5, %115, %cst_59 {dimension_numbers = #tpu.dot_dimension_numbers<[1], [0], [0], [1], [0, 0, 1, 1], [], []>} : vector<8x8xf32>, vector<8x8xf32>, vector<8x8xf32> -> vector<8x8xf32>
    %cst_60 = arith.constant dense<0.000000e+00> : vector<8x64xf32>
    %117 = tpu.matmul %116, %98, %cst_60 {dimension_numbers = #tpu.dot_dimension_numbers<[1], [0], [0], [1], [0, 0, 1, 1], [], []>} : vector<8x8xf32>, vector<8x64xf32>, vector<8x64xf32> -> vector<8x64xf32>
    %cst_61 = arith.constant 0.000000e+00 : f32
    %118 = vector.broadcast %cst_61 : f32 to vector<8x64xf32>
    %119 = arith.cmpf ogt, %117, %118 : vector<8x64xf32>
    %cst_62 = arith.constant 0.000000e+00 : f32
    %120 = vector.broadcast %cst_62 : f32 to vector<8x64xf32>
    %121 = arith.minimumf %117, %120 : vector<8x64xf32>
    %122 = math.exp %121 : vector<8x64xf32>
    %cst_63 = arith.constant 1.000000e+00 : f32
    %123 = vector.broadcast %cst_63 : f32 to vector<8x64xf32>
    %124 = arith.subf %122, %123 : vector<8x64xf32>
    %125 = arith.select %119, %117, %124 : vector<8x64xi1>, vector<8x64xf32>
    %126 = math.tanh %125 : vector<8x64xf32>
    %c8 = arith.constant 8 : index
    %c0_64 = arith.constant 0 : index
    %127 = vector.load %arg10[%c8, %c0_64] : memref<16x64xf32, #tpu.memory_space<vmem>>, vector<8x64xf32>
    tpu.vector_store %arg10[%c8, %c0_64], %126 {strides = array<i32>} : memref<16x64xf32, #tpu.memory_space<vmem>>, vector<8x64xf32>,
    return
  }
  func.func @transform_0(%arg0: i32) -> (i32, i32) {
    %c0_i32 = arith.constant 0 : i32
    %c0_i32_0 = arith.constant 0 : i32
    return %arg0, %c0_i32 : i32, i32
  }
  func.func @transform_1(%arg0: i32) -> (i32, i32) {
    %c0_i32 = arith.constant 0 : i32
    %c0_i32_0 = arith.constant 0 : i32
    %c0_i32_1 = arith.constant 0 : i32
    return %c0_i32, %c0_i32_0 : i32, i32
  }
  func.func @transform_2(%arg0: i32) -> (i32, i32) {
    %c0_i32 = arith.constant 0 : i32
    %c0_i32_0 = arith.constant 0 : i32
    %c0_i32_1 = arith.constant 0 : i32
    return %c0_i32, %c0_i32_0 : i32, i32
  }
  func.func @transform_3(%arg0: i32) -> (i32, i32) {
    %c0_i32 = arith.constant 0 : i32
    %c0_i32_0 = arith.constant 0 : i32
    %c0_i32_1 = arith.constant 0 : i32
    return %c0_i32, %c0_i32_0 : i32, i32
  }
  func.func @transform_4(%arg0: i32) -> (i32, i32) {
    %c0_i32 = arith.constant 0 : i32
    %c0_i32_0 = arith.constant 0 : i32
    %c0_i32_1 = arith.constant 0 : i32
    return %c0_i32, %c0_i32_0 : i32, i32
  }
  func.func @transform_5(%arg0: i32) -> (i32, i32) {
    %c0_i32 = arith.constant 0 : i32
    %c0_i32_0 = arith.constant 0 : i32
    %c0_i32_1 = arith.constant 0 : i32
    return %c0_i32, %c0_i32_0 : i32, i32
  }
  func.func @transform_6(%arg0: i32) -> (i32, i32) {
    %c0_i32 = arith.constant 0 : i32
    %c0_i32_0 = arith.constant 0 : i32
    %c0_i32_1 = arith.constant 0 : i32
    return %c0_i32, %c0_i32_0 : i32, i32
  }
  func.func @transform_7(%arg0: i32) -> (i32, i32) {
    %c0_i32 = arith.constant 0 : i32
    %c0_i32_0 = arith.constant 0 : i32
    %c0_i32_1 = arith.constant 0 : i32
    return %c0_i32, %c0_i32_0 : i32, i32
  }
  func.func @transform_8(%arg0: i32) -> (i32, i32) {
    %c0_i32 = arith.constant 0 : i32
    %c0_i32_0 = arith.constant 0 : i32
    %c0_i32_1 = arith.constant 0 : i32
    return %c0_i32, %c0_i32_0 : i32, i32
  }
  func.func @transform_9(%arg0: i32) -> (i32, i32) {
    %c0_i32 = arith.constant 0 : i32
    %c0_i32_0 = arith.constant 0 : i32
    return %arg0, %c0_i32 : i32, i32
  }
}

</mosaic_0001>

<llo_original>
// kernel: tpu_custom_call.1
$region0: #{tpu_custom_call.1}
  #allocation0 [shape = 'u32[]', space=smem, size = 0x4, offset = 0x4, fixed_abs, tag = 'smem constant byte address 0x4 - core index']
  #allocation1 [shape = 'u32[144,128]{1,0:T(1,128)}', space=vmem, size = 0x12000, scoped, tag = 'internal scratch']
  %s0 = inlined_call_operand.vmem [shape: f32[16,64], index: 0, kind: input, shape index: {}]
  %s1 = inlined_call_operand.vmem [shape: f32[64,64], index: 1, kind: input, shape index: {}]
  %s2 = inlined_call_operand.vmem [shape: f32[64,8], index: 2, kind: input, shape index: {}]
  %s3 = inlined_call_operand.hbm [shape: f32[8,64], index: 3, kind: input, shape index: {}]
  %s4 = inlined_call_operand.hbm [shape: f32[8,8], index: 4, kind: input, shape index: {}]
  %s5 = inlined_call_operand.vmem [shape: f32[64,64], index: 5, kind: input, shape index: {}]
  %s6 = inlined_call_operand.vmem [shape: f32[64,8], index: 6, kind: input, shape index: {}]
  %s7 = inlined_call_operand.hbm [shape: f32[8,64], index: 7, kind: input, shape index: {}]
  %s8 = inlined_call_operand.hbm [shape: f32[8,8], index: 8, kind: input, shape index: {}]
  %s9 = inlined_call_operand.hbm [shape: f32[16,64], index: 9, kind: output, shape index: {}]
  %s10 = sld [smem:[#allocation0]]
  $region62: #{tpu_custom_call.1} parent=0
    _
  %s12 = ssub.s32 1, %s10
  %s13 = scalar_select 0, %s12, %s10
  $region1: #{tpu_custom_call.1} parent=0
    #allocation2 [shape = 'u8[4096]{0}', space=vmem, size = 0x1000, scoped, tag = 'input window, operand 3, single buffered']
    #allocation3 [shape = 's32[1]{0}', space=sflag, size = 0x4, scoped, tag = 'scoped memory for tpu_custom_call.1']
    #allocation4 [shape = 's32[1]{0}', space=sflag, size = 0x4, scoped, tag = 'scoped memory for tpu_custom_call.1']
    #allocation5 [shape = 'u8[4096]{0}', space=vmem, size = 0x1000, scoped, tag = 'input window, operand 4, single buffered']
    #allocation6 [shape = 's32[1]{0}', space=sflag, size = 0x4, scoped, tag = 'scoped memory for tpu_custom_call.1']
    #allocation7 [shape = 'u8[4096]{0}', space=vmem, size = 0x1000, scoped, tag = 'input window, operand 7, single buffered']
    #allocation8 [shape = 'u8[4096]{0}', space=vmem, size = 0x1000, scoped, tag = 'input window, operand 8, single buffered']
    #allocation9 [shape = 's32[1]{0}', space=sflag, size = 0x4, scoped, tag = 'scoped memory for tpu_custom_call.1']
    #allocation10 [shape = 'u8[8192]{0}', space=vmem, size = 0x2000, scoped, tag = 'output window, operand 0, single buffered']
    %14 = vsyncpa [#allocation3], 0
    %15 = vsyncpa [#allocation6], 0
    %16 = vsyncpa [#allocation9], 0
    %17 = vsyncpa [#allocation4], 0
    // Predicated region
    $region2: #{tpu_custom_call.1} parent=1 // pred_check
      _
    $region3: #{tpu_custom_call.1} parent=1 // pred_check_branch
      %19 = sbr.rel (0) target = $region5
    $region4: #{tpu_custom_call.1} parent=1 // pred_region
      _
    $region5: #{tpu_custom_call.1} parent=1 // pred_fallthru
      _
    // Predicated region
    $region6: #{tpu_custom_call.1} parent=1 // pred_check
      _
    $region7: #{tpu_custom_call.1} parent=1 // pred_check_branch
      %21 = sbr.rel (0) target = $region9
    $region8: #{tpu_custom_call.1} parent=1 // pred_region
      _
    $region9: #{tpu_custom_call.1} parent=1 // pred_fallthru
      _
    // Predicated region
    $region10: #{tpu_custom_call.1} parent=1 // pred_check
      _
    $region11: #{tpu_custom_call.1} parent=1 // pred_check_branch
      %23 = sbr.rel (0) target = $region13
    $region12: #{tpu_custom_call.1} parent=1 // pred_region
      _
    $region13: #{tpu_custom_call.1} parent=1 // pred_fallthru
      _
    // Predicated region
    $region14: #{tpu_custom_call.1} parent=1 // pred_check
      _
    $region15: #{tpu_custom_call.1} parent=1 // pred_check_branch
      %25 = sbr.rel (0) target = $region17
    $region16: #{tpu_custom_call.1} parent=1 // pred_region
      %s27 = ssub.s32 128, 128
      %28 = vsyncadd [#allocation3], %s27
      %s30 = sshll.u32 [#allocation2], 4
      %s31 = int_to_ptr.vmem [resolvable:$true] %s30
      %33 = dma.hbm_to_vmem [thread:$0]  %s3, 128, %s31, [#allocation3]
    $region17: #{tpu_custom_call.1} parent=1 // pred_fallthru
      _
    // Predicated region
    $region18: #{tpu_custom_call.1} parent=1 // pred_check
      _
    $region19: #{tpu_custom_call.1} parent=1 // pred_check_branch
      %35 = sbr.rel (0) target = $region21
    $region20: #{tpu_custom_call.1} parent=1 // pred_region
      %s37 = ssub.s32 128, 128
      %38 = vsyncadd [#allocation6], %s37
      %s40 = sshll.u32 [#allocation5], 4
      %s41 = int_to_ptr.vmem [resolvable:$true] %s40
      %43 = dma.hbm_to_vmem [thread:$0]  %s4, 128, %s41, [#allocation6]
    $region21: #{tpu_custom_call.1} parent=1 // pred_fallthru
      _
    // Predicated region
    $region22: #{tpu_custom_call.1} parent=1 // pred_check
      _
    $region23: #{tpu_custom_call.1} parent=1 // pred_check_branch
      %45 = sbr.rel (0) target = $region25
    $region24: #{tpu_custom_call.1} parent=1 // pred_region
      _
    $region25: #{tpu_custom_call.1} parent=1 // pred_fallthru
      _
    // Predicated region
    $region26: #{tpu_custom_call.1} parent=1 // pred_check
      _
    $region27: #{tpu_custom_call.1} parent=1 // pred_check_branch
      %47 = sbr.rel (0) target = $region29
    $region28: #{tpu_custom_call.1} parent=1 // pred_region
      _
    $region29: #{tpu_custom_call.1} parent=1 // pred_fallthru
      _
    // Predicated region
    $region30: #{tpu_custom_call.1} parent=1 // pred_check
      _
    $region31: #{tpu_custom_call.1} parent=1 // pred_check_branch
      %49 = sbr.rel (0) target = $region33
    $region32: #{tpu_custom_call.1} parent=1 // pred_region
      %s51 = ssub.s32 128, 128
      %52 = vsyncadd [#allocation6], %s51
      %s54 = sshll.u32 [#allocation7], 4
      %s55 = int_to_ptr.vmem [resolvable:$true] %s54
      %57 = dma.hbm_to_vmem [thread:$0]  %s7, 128, %s55, [#allocation6]
    $region33: #{tpu_custom_call.1} parent=1 // pred_fallthru
      _
    // Predicated region
    $region34: #{tpu_custom_call.1} parent=1 // pred_check
      _
    $region35: #{tpu_custom_call.1} parent=1 // pred_check_branch
      %59 = sbr.rel (0) target = $region37
    $region36: #{tpu_custom_call.1} parent=1 // pred_region
      %s61 = ssub.s32 128, 128
      %62 = vsyncadd [#allocation9], %s61
      %s64 = sshll.u32 [#allocation8], 4
      %s65 = int_to_ptr.vmem [resolvable:$true] %s64
      %67 = dma.hbm_to_vmem [thread:$0]  %s8, 128, %s65, [#allocation9]
    $region37: #{tpu_custom_call.1} parent=1 // pred_fallthru
      _
    // Predicated region
    $region38: #{tpu_custom_call.1} parent=1 // pred_check
      _
    $region39: #{tpu_custom_call.1} parent=1 // pred_check_branch
      %69 = sbr.rel (0) target = $region41
    $region40: #{tpu_custom_call.1} parent=1 // pred_region
      %70 = dma.done [#allocation3], 128
    $region41: #{tpu_custom_call.1} parent=1 // pred_fallthru
      _
    // Predicated region
    $region42: #{tpu_custom_call.1} parent=1 // pred_check
      _
    $region43: #{tpu_custom_call.1} parent=1 // pred_check_branch
      %72 = sbr.rel (0) target = $region45
    $region44: #{tpu_custom_call.1} parent=1 // pred_region
      %73 = dma.done [#allocation6], 128
    $region45: #{tpu_custom_call.1} parent=1 // pred_fallthru
      _
    // Predicated region
    $region46: #{tpu_custom_call.1} parent=1 // pred_check
      _
    $region47: #{tpu_custom_call.1} parent=1 // pred_check_branch
      %75 = sbr.rel (0) target = $region49
    $region48: #{tpu_custom_call.1} parent=1 // pred_region
      %76 = dma.done [#allocation6], 128
    $region49: #{tpu_custom_call.1} parent=1 // pred_fallthru
      _
    // Predicated region
    $region50: #{tpu_custom_call.1} parent=1 // pred_check
      _
    $region51: #{tpu_custom_call.1} parent=1 // pred_check_branch
      %78 = sbr.rel (0) target = $region53
    $region52: #{tpu_custom_call.1} parent=1 // pred_region
      %79 = dma.done [#allocation9], 128
    $region53: #{tpu_custom_call.1} parent=1 // pred_fallthru
      _
    %v80 = vld [vmem:[%s2] sm:$0xff]
    %v81 = vld [vmem:[%s2 + $0x8] sm:$0xff]
    %v82 = vld [vmem:[%s2 + $0x10] sm:$0xff]
    %v83 = vld [vmem:[%s2 + $0x18] sm:$0xff]
    %v84 = vld [vmem:[%s2 + $0x20] sm:$0xff]
    %v85 = vld [vmem:[%s2 + $0x28] sm:$0xff]
    %v86 = vld [vmem:[%s2 + $0x30] sm:$0xff]
    %v87 = vld [vmem:[%s2 + $0x38] sm:$0xff]
    %v88 = vld [vmem:[#allocation2] sm:$0xff]
    %v89 = vld [vmem:[#allocation5] sm:$0xff]
    %v90 = vld [vmem:[%s6] sm:$0xff]
    %v91 = vld [vmem:[%s6 + $0x8] sm:$0xff]
    %v92 = vld [vmem:[%s6 + $0x10] sm:$0xff]
    %v93 = vld [vmem:[%s6 + $0x18] sm:$0xff]
    %v94 = vld [vmem:[%s6 + $0x20] sm:$0xff]
    %v95 = vld [vmem:[%s6 + $0x28] sm:$0xff]
    %v96 = vld [vmem:[%s6 + $0x30] sm:$0xff]
    %v97 = vld [vmem:[%s6 + $0x38] sm:$0xff]
    %v98 = vld [vmem:[#allocation7] sm:$0xff]
    %v99 = vld [vmem:[#allocation8] sm:$0xff]
    %v100 = vld [vmem:[%s0] sm:$0xff]
    %v101 = vld [vmem:[%s0 + $0x8] sm:$0xff]
    %v102 = vld [vmem:[%s1] sm:$0xff]
    %v103 = vld [vmem:[%s1 + $0x8] sm:$0xff]
    %v104 = vld [vmem:[%s1 + $0x10] sm:$0xff]
    %v105 = vld [vmem:[%s1 + $0x18] sm:$0xff]
    %v106 = vld [vmem:[%s1 + $0x20] sm:$0xff]
    %v107 = vld [vmem:[%s1 + $0x28] sm:$0xff]
    %v108 = vld [vmem:[%s1 + $0x30] sm:$0xff]
    %v109 = vld [vmem:[%s1 + $0x38] sm:$0xff]
    %vm110 = vcmask 523264
    %v112 = vsel %vm110, %v100, 0
    %v115 = vsel %vm110, %v101, 0
    %117 = vmatprep.subr.mxu0 0.0
    %118 = vmatpush1.msra.mxu0 0.0
    %119 = vmatprep.subr.mxu0 0.0
    %120 = vmatpush1.msra.mxu0 0.0
    %121 = vmatprep.subr.mxu0 0.0
    %122 = vmatpush1.msra.mxu0 0.0
    %123 = vmatprep.subr.mxu0 0.0
    %124 = vmatpush1.msra.mxu0 0.0
    %125 = vmatprep.subr.mxu0 0.0
    %126 = vmatpush1.msra.mxu0 0.0
    %127 = vmatprep.subr.mxu0 0.0
    %128 = vmatpush1.msra.mxu0 0.0
    %129 = vmatprep.subr.mxu0 0.0
    %130 = vmatpush1.msra.mxu0 0.0
    %131 = vmatprep.subr.mxu0 0.0
    %132 = vmatpush1.msra.mxu0 0.0
    %133 = vmatprep.subr.mxu0 0.0
    %134 = vmatpush1.msra.mxu0 %v109
    %135 = vmatprep.subr.mxu0 0.0
    %136 = vmatpush1.msra.mxu0 %v108
    %137 = vmatprep.subr.mxu0 0.0
    %138 = vmatpush1.msra.mxu0 %v107
    %139 = vmatprep.subr.mxu0 0.0
    %140 = vmatpush1.msra.mxu0 %v106
    %141 = vmatprep.subr.mxu0 0.0
    %142 = vmatpush1.msra.mxu0 %v105
    %143 = vmatprep.subr.mxu0 0.0
    %144 = vmatpush1.msra.mxu0 %v104
    %145 = vmatprep.subr.mxu0 0.0
    %146 = vmatpush1.msra.mxu0 %v103
    %147 = vmatprep.subr.mxu0 0.0
    %148 = vmatpush1.msra.mxu0 %v102
    %149 = vmatprep.subr.mxu0 0.0
    %150 = vmatpush2.msra.mxu0 0.0
    %151 = vmatprep.subr.mxu0 0.0
    %152 = vmatpush2.msra.mxu0 0.0
    %153 = vmatprep.subr.mxu0 0.0
    %154 = vmatpush2.msra.mxu0 0.0
    %155 = vmatprep.subr.mxu0 0.0
    %156 = vmatpush2.msra.mxu0 0.0
    %157 = vmatprep.subr.mxu0 0.0
    %158 = vmatpush2.msra.mxu0 0.0
    %159 = vmatprep.subr.mxu0 0.0
    %160 = vmatpush2.msra.mxu0 0.0
    %161 = vmatprep.subr.mxu0 0.0
    %162 = vmatpush2.msra.mxu0 0.0
    %163 = vmatprep.subr.mxu0 0.0
    %164 = vmatpush2.msra.mxu0 0.0
    %165 = vmatprep.subr.mxu0 0.0
    %166 = vmatpush2.msra.mxu0 0.0
    %167 = vmatprep.subr.mxu0 0.0
    %168 = vmatpush2.msra.mxu0 0.0
    %169 = vmatprep.subr.mxu0 0.0
    %170 = vmatpush2.msra.mxu0 0.0
    %171 = vmatprep.subr.mxu0 0.0
    %172 = vmatpush2.msra.mxu0 0.0
    %173 = vmatprep.subr.mxu0 0.0
    %174 = vmatpush2.msra.mxu0 0.0
    %175 = vmatprep.subr.mxu0 0.0
    %176 = vmatpush2.msra.mxu0 0.0
    %177 = vmatprep.subr.mxu0 0.0
    %178 = vmatpush2.msra.mxu0 0.0
    %179 = vmatprep.subr.mxu0 0.0
    %180 = vmatpush2.msra.mxu0 0.0
    %181 = vmatprep.mubr.f32.mxu0 0.0
    %182 = vmatmul.mubr.f32.gmra.mxu0 %v112
    %v183 = vpop.f32.mrf.mxu0
    %v184 = vadd.f32 0.0, %v183
    %v185 = vpop.f32.mrf.mxu0
    %186 = vmatprep.mubr.f32.mxu0 0.0
    %187 = vmatmul.mubr.f32.gmra.mxu0 %v115
    %v188 = vpop.f32.mrf.mxu0
    %v189 = vadd.f32 0.0, %v188
    %v190 = vpop.f32.mrf.mxu0
    %191 = vdwg.mxu0
    %v193 = vsel %vm110, %v88, 0
    %v196 = vsel %vm110, %v184, 0
    %198 = vmatprep.subr.mxu0 0.0
    %199 = vmatpush1.xpose.msra.mxu0 0.0
    %200 = vmatprep.subr.mxu0 0.0
    %201 = vmatpush1.xpose.msra.mxu0 0.0
    %202 = vmatprep.subr.mxu0 0.0
    %203 = vmatpush1.xpose.msra.mxu0 0.0
    %204 = vmatprep.subr.mxu0 0.0
    %205 = vmatpush1.xpose.msra.mxu0 0.0
    %206 = vmatprep.subr.mxu0 0.0
    %207 = vmatpush1.xpose.msra.mxu0 0.0
    %208 = vmatprep.subr.mxu0 0.0
    %209 = vmatpush1.xpose.msra.mxu0 0.0
    %210 = vmatprep.subr.mxu0 0.0
    %211 = vmatpush1.xpose.msra.mxu0 0.0
    %212 = vmatprep.subr.mxu0 0.0
    %213 = vmatpush1.xpose.msra.mxu0 0.0
    %214 = vmatprep.subr.mxu0 0.0
    %215 = vmatpush1.xpose.msra.mxu0 0.0
    %216 = vmatprep.subr.mxu0 0.0
    %217 = vmatpush1.xpose.msra.mxu0 0.0
    %218 = vmatprep.subr.mxu0 0.0
    %219 = vmatpush1.xpose.msra.mxu0 0.0
    %220 = vmatprep.subr.mxu0 0.0
    %221 = vmatpush1.xpose.msra.mxu0 0.0
    %222 = vmatprep.subr.mxu0 0.0
    %223 = vmatpush1.xpose.msra.mxu0 0.0
    %224 = vmatprep.subr.mxu0 0.0
    %225 = vmatpush1.xpose.msra.mxu0 0.0
    %226 = vmatprep.subr.mxu0 0.0
    %227 = vmatpush1.xpose.msra.mxu0 0.0
    %228 = vmatprep.subr.mxu0 0.0
    %229 = vmatpush1.xpose.msra.mxu0 %v196
    %230 = vmatprep.subr.mxu0 0.0
    %231 = vmatpush2.xpose.msra.mxu0 0.0
    %232 = vmatprep.subr.mxu0 0.0
    %233 = vmatpush2.xpose.msra.mxu0 0.0
    %234 = vmatprep.subr.mxu0 0.0
    %235 = vmatpush2.xpose.msra.mxu0 0.0
    %236 = vmatprep.subr.mxu0 0.0
    %237 = vmatpush2.xpose.msra.mxu0 0.0
    %238 = vmatprep.subr.mxu0 0.0
    %239 = vmatpush2.xpose.msra.mxu0 0.0
    %240 = vmatprep.subr.mxu0 0.0
    %241 = vmatpush2.xpose.msra.mxu0 0.0
    %242 = vmatprep.subr.mxu0 0.0
    %243 = vmatpush2.xpose.msra.mxu0 0.0
    %244 = vmatprep.subr.mxu0 0.0
    %245 = vmatpush2.xpose.msra.mxu0 0.0
    %246 = vmatprep.subr.mxu0 0.0
    %247 = vmatpush2.xpose.msra.mxu0 0.0
    %248 = vmatprep.subr.mxu0 0.0
    %249 = vmatpush2.xpose.msra.mxu0 0.0
    %250 = vmatprep.subr.mxu0 0.0
    %251 = vmatpush2.xpose.msra.mxu0 0.0
    %252 = vmatprep.subr.mxu0 0.0
    %253 = vmatpush2.xpose.msra.mxu0 0.0
    %254 = vmatprep.subr.mxu0 0.0
    %255 = vmatpush2.xpose.msra.mxu0 0.0
    %256 = vmatprep.subr.mxu0 0.0
    %257 = vmatpush2.xpose.msra.mxu0 0.0
    %258 = vmatprep.subr.mxu0 0.0
    %259 = vmatpush2.xpose.msra.mxu0 0.0
    %260 = vmatprep.subr.mxu0 0.0
    %261 = vmatpush2.xpose.msra.mxu0 0.0
    %262 = vmatprep.mubr.f32.mxu0 0.0
    %263 = vmatmul.mubr.f32.gmra.mxu0 %v193
    %v264 = vpop.f32.mrf.mxu0
    %v265 = vadd.f32 0.0, %v264
    %v266 = vpop.f32.mrf.mxu0
    %267 = vdwg.mxu0
    %268 = vmatprep.subr.mxu0 0.0
    %269 = vmatpush1.msra.mxu0 0.0
    %270 = vmatprep.subr.mxu0 0.0
    %271 = vmatpush1.msra.mxu0 0.0
    %272 = vmatprep.subr.mxu0 0.0
    %273 = vmatpush1.msra.mxu0 0.0
    %274 = vmatprep.subr.mxu0 0.0
    %275 = vmatpush1.msra.mxu0 0.0
    %276 = vmatprep.subr.mxu0 0.0
    %277 = vmatpush1.msra.mxu0 0.0
    %278 = vmatprep.subr.mxu0 0.0
    %279 = vmatpush1.msra.mxu0 0.0
    %280 = vmatprep.subr.mxu0 0.0
    %281 = vmatpush1.msra.mxu0 0.0
    %282 = vmatprep.subr.mxu0 0.0
    %283 = vmatpush1.msra.mxu0 0.0
    %284 = vmatprep.subr.mxu0 0.0
    %285 = vmatpush1.msra.mxu0 %v87
    %286 = vmatprep.subr.mxu0 0.0
    %287 = vmatpush1.msra.mxu0 %v86
    %288 = vmatprep.subr.mxu0 0.0
    %289 = vmatpush1.msra.mxu0 %v85
    %290 = vmatprep.subr.mxu0 0.0
    %291 = vmatpush1.msra.mxu0 %v84
    %292 = vmatprep.subr.mxu0 0.0
    %293 = vmatpush1.msra.mxu0 %v83
    %294 = vmatprep.subr.mxu0 0.0
    %295 = vmatpush1.msra.mxu0 %v82
    %296 = vmatprep.subr.mxu0 0.0
    %297 = vmatpush1.msra.mxu0 %v81
    %298 = vmatprep.subr.mxu0 0.0
    %299 = vmatpush1.msra.mxu0 %v80
    %300 = vmatprep.subr.mxu0 0.0
    %301 = vmatpush2.msra.mxu0 0.0
    %302 = vmatprep.subr.mxu0 0.0
    %303 = vmatpush2.msra.mxu0 0.0
    %304 = vmatprep.subr.mxu0 0.0
    %305 = vmatpush2.msra.mxu0 0.0
    %306 = vmatprep.subr.mxu0 0.0
    %307 = vmatpush2.msra.mxu0 0.0
    %308 = vmatprep.subr.mxu0 0.0
    %309 = vmatpush2.msra.mxu0 0.0
    %310 = vmatprep.subr.mxu0 0.0
    %311 = vmatpush2.msra.mxu0 0.0
    %312 = vmatprep.subr.mxu0 0.0
    %313 = vmatpush2.msra.mxu0 0.0
    %314 = vmatprep.subr.mxu0 0.0
    %315 = vmatpush2.msra.mxu0 0.0
    %316 = vmatprep.subr.mxu0 0.0
    %317 = vmatpush2.msra.mxu0 0.0
    %318 = vmatprep.subr.mxu0 0.0
    %319 = vmatpush2.msra.mxu0 0.0
    %320 = vmatprep.subr.mxu0 0.0
    %321 = vmatpush2.msra.mxu0 0.0
    %322 = vmatprep.subr.mxu0 0.0
    %323 = vmatpush2.msra.mxu0 0.0
    %324 = vmatprep.subr.mxu0 0.0
    %325 = vmatpush2.msra.mxu0 0.0
    %326 = vmatprep.subr.mxu0 0.0
    %327 = vmatpush2.msra.mxu0 0.0
    %328 = vmatprep.subr.mxu0 0.0
    %329 = vmatpush2.msra.mxu0 0.0
    %330 = vmatprep.subr.mxu0 0.0
    %331 = vmatpush2.msra.mxu0 0.0
    %332 = vmatprep.mubr.f32.mxu0 0.0
    %333 = vmatmul.mubr.f32.gmra.mxu0 %v196
    %v334 = vpop.f32.mrf.mxu0
    %v335 = vadd.f32 %v265, %v334
    %v336 = vpop.f32.mrf.mxu0
    %337 = vdwg.mxu0
    %vm338 = vcmp.gt.f32.partialorder %v335, 0.0
    %v339 = vmul.f32 %v335, 0.2
    %v340 = vsel %vm338, %v335, %v339
    %vm341 = vcmask 64512
    %v342 = vsel %vm341, %v340, -inf
    %343 = vmax.xlane.f32.xlu0 %v342
    %v344 = vpop.xlane.xlu0 %343
    %v345 = vsub.f32 %v340, %v344
    %v346 = vmul.f32 %v345, 1.442695
    %v347 = vpow.pop %v346
    %v348 = vsel %vm341, %v347, 0.0
    %349 = vadd.xlane.f32.xlu0 %v348
    %v350 = vpop.xlane.xlu0 %349
    %v351 = vrcp.pop %v350
    %v352 = vmul.f32 %v347, %v351
    %v354 = vsel %vm341, %v89, 0
    %356 = vmatprep.subr.mxu0 0.0
    %357 = vmatpush1.msra.mxu0 0.0
    %358 = vmatprep.subr.mxu0 0.0
    %359 = vmatpush1.msra.mxu0 0.0
    %360 = vmatprep.subr.mxu0 0.0
    %361 = vmatpush1.msra.mxu0 0.0
    %362 = vmatprep.subr.mxu0 0.0
    %363 = vmatpush1.msra.mxu0 0.0
    %364 = vmatprep.subr.mxu0 0.0
    %365 = vmatpush1.msra.mxu0 0.0
    %366 = vmatprep.subr.mxu0 0.0
    %367 = vmatpush1.msra.mxu0 0.0
    %368 = vmatprep.subr.mxu0 0.0
    %369 = vmatpush1.msra.mxu0 0.0
    %370 = vmatprep.subr.mxu0 0.0
    %371 = vmatpush1.msra.mxu0 0.0
    %372 = vmatprep.subr.mxu0 0.0
    %373 = vmatpush1.msra.mxu0 0.0
    %374 = vmatprep.subr.mxu0 0.0
    %375 = vmatpush1.msra.mxu0 0.0
    %376 = vmatprep.subr.mxu0 0.0
    %377 = vmatpush1.msra.mxu0 0.0
    %378 = vmatprep.subr.mxu0 0.0
    %379 = vmatpush1.msra.mxu0 0.0
    %380 = vmatprep.subr.mxu0 0.0
    %381 = vmatpush1.msra.mxu0 0.0
    %382 = vmatprep.subr.mxu0 0.0
    %383 = vmatpush1.msra.mxu0 0.0
    %384 = vmatprep.subr.mxu0 0.0
    %385 = vmatpush1.msra.mxu0 0.0
    %386 = vmatprep.subr.mxu0 0.0
    %387 = vmatpush1.msra.mxu0 %v352
    %388 = vmatprep.subr.mxu0 0.0
    %389 = vmatpush2.msra.mxu0 0.0
    %390 = vmatprep.subr.mxu0 0.0
    %391 = vmatpush2.msra.mxu0 0.0
    %392 = vmatprep.subr.mxu0 0.0
    %393 = vmatpush2.msra.mxu0 0.0
    %394 = vmatprep.subr.mxu0 0.0
    %395 = vmatpush2.msra.mxu0 0.0
    %396 = vmatprep.subr.mxu0 0.0
    %397 = vmatpush2.msra.mxu0 0.0
    %398 = vmatprep.subr.mxu0 0.0
    %399 = vmatpush2.msra.mxu0 0.0
    %400 = vmatprep.subr.mxu0 0.0
    %401 = vmatpush2.msra.mxu0 0.0
    %402 = vmatprep.subr.mxu0 0.0
    %403 = vmatpush2.msra.mxu0 0.0
    %404 = vmatprep.subr.mxu0 0.0
    %405 = vmatpush2.msra.mxu0 0.0
    %406 = vmatprep.subr.mxu0 0.0
    %407 = vmatpush2.msra.mxu0 0.0
    %408 = vmatprep.subr.mxu0 0.0
    %409 = vmatpush2.msra.mxu0 0.0
    %410 = vmatprep.subr.mxu0 0.0
    %411 = vmatpush2.msra.mxu0 0.0
    %412 = vmatprep.subr.mxu0 0.0
    %413 = vmatpush2.msra.mxu0 0.0
    %414 = vmatprep.subr.mxu0 0.0
    %415 = vmatpush2.msra.mxu0 0.0
    %416 = vmatprep.subr.mxu0 0.0
    %417 = vmatpush2.msra.mxu0 0.0
    %418 = vmatprep.subr.mxu0 0.0
    %419 = vmatpush2.msra.mxu0 0.0
    %420 = vmatprep.mubr.f32.mxu0 0.0
    %421 = vmatmul.mubr.f32.gmra.mxu0 %v354
    %v422 = vpop.f32.mrf.mxu0
    %v423 = vadd.f32 0.0, %v422
    %v424 = vpop.f32.mrf.mxu0
    %425 = vdwg.mxu0
    %v427 = vsel %vm341, %v423, 0
    %429 = vmatprep.subr.mxu0 0.0
    %430 = vmatpush1.msra.mxu0 0.0
    %431 = vmatprep.subr.mxu0 0.0
    %432 = vmatpush1.msra.mxu0 0.0
    %433 = vmatprep.subr.mxu0 0.0
    %434 = vmatpush1.msra.mxu0 0.0
    %435 = vmatprep.subr.mxu0 0.0
    %436 = vmatpush1.msra.mxu0 0.0
    %437 = vmatprep.subr.mxu0 0.0
    %438 = vmatpush1.msra.mxu0 0.0
    %439 = vmatprep.subr.mxu0 0.0
    %440 = vmatpush1.msra.mxu0 0.0
    %441 = vmatprep.subr.mxu0 0.0
    %442 = vmatpush1.msra.mxu0 0.0
    %443 = vmatprep.subr.mxu0 0.0
    %444 = vmatpush1.msra.mxu0 0.0
    %445 = vmatprep.subr.mxu0 0.0
    %446 = vmatpush1.msra.mxu0 0.0
    %447 = vmatprep.subr.mxu0 0.0
    %448 = vmatpush1.msra.mxu0 0.0
    %449 = vmatprep.subr.mxu0 0.0
    %450 = vmatpush1.msra.mxu0 0.0
    %451 = vmatprep.subr.mxu0 0.0
    %452 = vmatpush1.msra.mxu0 0.0
    %453 = vmatprep.subr.mxu0 0.0
    %454 = vmatpush1.msra.mxu0 0.0
    %455 = vmatprep.subr.mxu0 0.0
    %456 = vmatpush1.msra.mxu0 0.0
    %457 = vmatprep.subr.mxu0 0.0
    %458 = vmatpush1.msra.mxu0 0.0
    %459 = vmatprep.subr.mxu0 0.0
    %460 = vmatpush1.msra.mxu0 %v184
    %461 = vmatprep.subr.mxu0 0.0
    %462 = vmatpush2.msra.mxu0 0.0
    %463 = vmatprep.subr.mxu0 0.0
    %464 = vmatpush2.msra.mxu0 0.0
    %465 = vmatprep.subr.mxu0 0.0
    %466 = vmatpush2.msra.mxu0 0.0
    %467 = vmatprep.subr.mxu0 0.0
    %468 = vmatpush2.msra.mxu0 0.0
    %469 = vmatprep.subr.mxu0 0.0
    %470 = vmatpush2.msra.mxu0 0.0
    %471 = vmatprep.subr.mxu0 0.0
    %472 = vmatpush2.msra.mxu0 0.0
    %473 = vmatprep.subr.mxu0 0.0
    %474 = vmatpush2.msra.mxu0 0.0
    %475 = vmatprep.subr.mxu0 0.0
    %476 = vmatpush2.msra.mxu0 0.0
    %477 = vmatprep.subr.mxu0 0.0
    %478 = vmatpush2.msra.mxu0 0.0
    %479 = vmatprep.subr.mxu0 0.0
    %480 = vmatpush2.msra.mxu0 0.0
    %481 = vmatprep.subr.mxu0 0.0
    %482 = vmatpush2.msra.mxu0 0.0
    %483 = vmatprep.subr.mxu0 0.0
    %484 = vmatpush2.msra.mxu0 0.0
    %485 = vmatprep.subr.mxu0 0.0
    %486 = vmatpush2.msra.mxu0 0.0
    %487 = vmatprep.subr.mxu0 0.0
    %488 = vmatpush2.msra.mxu0 0.0
    %489 = vmatprep.subr.mxu0 0.0
    %490 = vmatpush2.msra.mxu0 0.0
    %491 = vmatprep.subr.mxu0 0.0
    %492 = vmatpush2.msra.mxu0 0.0
    %493 = vmatprep.mubr.f32.mxu0 0.0
    %494 = vmatmul.mubr.f32.gmra.mxu0 %v427
    %v495 = vpop.f32.mrf.mxu0
    %v496 = vadd.f32 0.0, %v495
    %v497 = vpop.f32.mrf.mxu0
    %498 = vdwg.mxu0
    %vm499 = vcmp.gt.f32.partialorder %v496, 0.0
    %v500 = vmin.f32 %v496, 0.0
    %v501 = vmul.f32 %v500, 1.442695
    %v502 = vpow.pop %v501
    %v503 = vsub.f32 %v502, 1.0
    %v504 = vsel %vm499, %v496, %v503
    %v506 = vsel %vm110, %v189, 0
    %508 = vmatprep.subr.mxu0 0.0
    %509 = vmatpush1.xpose.msra.mxu0 0.0
    %510 = vmatprep.subr.mxu0 0.0
    %511 = vmatpush1.xpose.msra.mxu0 0.0
    %512 = vmatprep.subr.mxu0 0.0
    %513 = vmatpush1.xpose.msra.mxu0 0.0
    %514 = vmatprep.subr.mxu0 0.0
    %515 = vmatpush1.xpose.msra.mxu0 0.0
    %516 = vmatprep.subr.mxu0 0.0
    %517 = vmatpush1.xpose.msra.mxu0 0.0
    %518 = vmatprep.subr.mxu0 0.0
    %519 = vmatpush1.xpose.msra.mxu0 0.0
    %520 = vmatprep.subr.mxu0 0.0
    %521 = vmatpush1.xpose.msra.mxu0 0.0
    %522 = vmatprep.subr.mxu0 0.0
    %523 = vmatpush1.xpose.msra.mxu0 0.0
    %524 = vmatprep.subr.mxu0 0.0
    %525 = vmatpush1.xpose.msra.mxu0 0.0
    %526 = vmatprep.subr.mxu0 0.0
    %527 = vmatpush1.xpose.msra.mxu0 0.0
    %528 = vmatprep.subr.mxu0 0.0
    %529 = vmatpush1.xpose.msra.mxu0 0.0
    %530 = vmatprep.subr.mxu0 0.0
    %531 = vmatpush1.xpose.msra.mxu0 0.0
    %532 = vmatprep.subr.mxu0 0.0
    %533 = vmatpush1.xpose.msra.mxu0 0.0
    %534 = vmatprep.subr.mxu0 0.0
    %535 = vmatpush1.xpose.msra.mxu0 0.0
    %536 = vmatprep.subr.mxu0 0.0
    %537 = vmatpush1.xpose.msra.mxu0 0.0
    %538 = vmatprep.subr.mxu0 0.0
    %539 = vmatpush1.xpose.msra.mxu0 %v506
    %540 = vmatprep.subr.mxu0 0.0
    %541 = vmatpush2.xpose.msra.mxu0 0.0
    %542 = vmatprep.subr.mxu0 0.0
    %543 = vmatpush2.xpose.msra.mxu0 0.0
    %544 = vmatprep.subr.mxu0 0.0
    %545 = vmatpush2.xpose.msra.mxu0 0.0
    %546 = vmatprep.subr.mxu0 0.0
    %547 = vmatpush2.xpose.msra.mxu0 0.0
    %548 = vmatprep.subr.mxu0 0.0
    %549 = vmatpush2.xpose.msra.mxu0 0.0
    %550 = vmatprep.subr.mxu0 0.0
    %551 = vmatpush2.xpose.msra.mxu0 0.0
    %552 = vmatprep.subr.mxu0 0.0
    %553 = vmatpush2.xpose.msra.mxu0 0.0
    %554 = vmatprep.subr.mxu0 0.0
    %555 = vmatpush2.xpose.msra.mxu0 0.0
    %556 = vmatprep.subr.mxu0 0.0
    %557 = vmatpush2.xpose.msra.mxu0 0.0
    %558 = vmatprep.subr.mxu0 0.0
    %559 = vmatpush2.xpose.msra.mxu0 0.0
    %560 = vmatprep.subr.mxu0 0.0
    %561 = vmatpush2.xpose.msra.mxu0 0.0
    %562 = vmatprep.subr.mxu0 0.0
    %563 = vmatpush2.xpose.msra.mxu0 0.0
    %564 = vmatprep.subr.mxu0 0.0
    %565 = vmatpush2.xpose.msra.mxu0 0.0
    %566 = vmatprep.subr.mxu0 0.0
    %567 = vmatpush2.xpose.msra.mxu0 0.0
    %568 = vmatprep.subr.mxu0 0.0
    %569 = vmatpush2.xpose.msra.mxu0 0.0
    %570 = vmatprep.subr.mxu0 0.0
    %571 = vmatpush2.xpose.msra.mxu0 0.0
    %572 = vmatprep.mubr.f32.mxu0 0.0
    %573 = vmatmul.mubr.f32.gmra.mxu0 %v193
    %v574 = vpop.f32.mrf.mxu0
    %v575 = vadd.f32 0.0, %v574
    %v576 = vpop.f32.mrf.mxu0
    %577 = vdwg.mxu0
    %578 = vmatprep.subr.mxu0 0.0
    %579 = vmatpush1.msra.mxu0 0.0
    %580 = vmatprep.subr.mxu0 0.0
    %581 = vmatpush1.msra.mxu0 0.0
    %582 = vmatprep.subr.mxu0 0.0
    %583 = vmatpush1.msra.mxu0 0.0
    %584 = vmatprep.subr.mxu0 0.0
    %585 = vmatpush1.msra.mxu0 0.0
    %586 = vmatprep.subr.mxu0 0.0
    %587 = vmatpush1.msra.mxu0 0.0
    %588 = vmatprep.subr.mxu0 0.0
    %589 = vmatpush1.msra.mxu0 0.0
    %590 = vmatprep.subr.mxu0 0.0
    %591 = vmatpush1.msra.mxu0 0.0
    %592 = vmatprep.subr.mxu0 0.0
    %593 = vmatpush1.msra.mxu0 0.0
    %594 = vmatprep.subr.mxu0 0.0
    %595 = vmatpush1.msra.mxu0 %v87
    %596 = vmatprep.subr.mxu0 0.0
    %597 = vmatpush1.msra.mxu0 %v86
    %598 = vmatprep.subr.mxu0 0.0
    %599 = vmatpush1.msra.mxu0 %v85
    %600 = vmatprep.subr.mxu0 0.0
    %601 = vmatpush1.msra.mxu0 %v84
    %602 = vmatprep.subr.mxu0 0.0
    %603 = vmatpush1.msra.mxu0 %v83
    %604 = vmatprep.subr.mxu0 0.0
    %605 = vmatpush1.msra.mxu0 %v82
    %606 = vmatprep.subr.mxu0 0.0
    %607 = vmatpush1.msra.mxu0 %v81
    %608 = vmatprep.subr.mxu0 0.0
    %609 = vmatpush1.msra.mxu0 %v80
    %610 = vmatprep.subr.mxu0 0.0
    %611 = vmatpush2.msra.mxu0 0.0
    %612 = vmatprep.subr.mxu0 0.0
    %613 = vmatpush2.msra.mxu0 0.0
    %614 = vmatprep.subr.mxu0 0.0
    %615 = vmatpush2.msra.mxu0 0.0
    %616 = vmatprep.subr.mxu0 0.0
    %617 = vmatpush2.msra.mxu0 0.0
    %618 = vmatprep.subr.mxu0 0.0
    %619 = vmatpush2.msra.mxu0 0.0
    %620 = vmatprep.subr.mxu0 0.0
    %621 = vmatpush2.msra.mxu0 0.0
    %622 = vmatprep.subr.mxu0 0.0
    %623 = vmatpush2.msra.mxu0 0.0
    %624 = vmatprep.subr.mxu0 0.0
    %625 = vmatpush2.msra.mxu0 0.0
    %626 = vmatprep.subr.mxu0 0.0
    %627 = vmatpush2.msra.mxu0 0.0
    %628 = vmatprep.subr.mxu0 0.0
    %629 = vmatpush2.msra.mxu0 0.0
    %630 = vmatprep.subr.mxu0 0.0
    %631 = vmatpush2.msra.mxu0 0.0
    %632 = vmatprep.subr.mxu0 0.0
    %633 = vmatpush2.msra.mxu0 0.0
    %634 = vmatprep.subr.mxu0 0.0
    %635 = vmatpush2.msra.mxu0 0.0
    %636 = vmatprep.subr.mxu0 0.0
    %637 = vmatpush2.msra.mxu0 0.0
    %638 = vmatprep.subr.mxu0 0.0
    %639 = vmatpush2.msra.mxu0 0.0
    %640 = vmatprep.subr.mxu0 0.0
    %641 = vmatpush2.msra.mxu0 0.0
    %642 = vmatprep.mubr.f32.mxu0 0.0
    %643 = vmatmul.mubr.f32.gmra.mxu0 %v506
    %v644 = vpop.f32.mrf.mxu0
    %v645 = vadd.f32 %v575, %v644
    %v646 = vpop.f32.mrf.mxu0
    %647 = vdwg.mxu0
    %vm648 = vcmp.gt.f32.partialorder %v645, 0.0
    %v649 = vmul.f32 %v645, 0.2
    %v650 = vsel %vm648, %v645, %v649
    %v651 = vsel %vm341, %v650, -inf
    %652 = vmax.xlane.f32.xlu0 %v651
    %v653 = vpop.xlane.xlu0 %652
    %v654 = vsub.f32 %v650, %v653
    %v655 = vmul.f32 %v654, 1.442695
    %v656 = vpow.pop %v655
    %v657 = vsel %vm341, %v656, 0.0
    %658 = vadd.xlane.f32.xlu0 %v657
    %v659 = vpop.xlane.xlu0 %658
    %v660 = vrcp.pop %v659
    %v661 = vmul.f32 %v656, %v660
    %662 = vmatprep.subr.mxu0 0.0
    %663 = vmatpush1.msra.mxu0 0.0
    %664 = vmatprep.subr.mxu0 0.0
    %665 = vmatpush1.msra.mxu0 0.0
    %666 = vmatprep.subr.mxu0 0.0
    %667 = vmatpush1.msra.mxu0 0.0
    %668 = vmatprep.subr.mxu0 0.0
    %669 = vmatpush1.msra.mxu0 0.0
    %670 = vmatprep.subr.mxu0 0.0
    %671 = vmatpush1.msra.mxu0 0.0
    %672 = vmatprep.subr.mxu0 0.0
    %673 = vmatpush1.msra.mxu0 0.0
    %674 = vmatprep.subr.mxu0 0.0
    %675 = vmatpush1.msra.mxu0 0.0
    %676 = vmatprep.subr.mxu0 0.0
    %677 = vmatpush1.msra.mxu0 0.0
    %678 = vmatprep.subr.mxu0 0.0
    %679 = vmatpush1.msra.mxu0 0.0
    %680 = vmatprep.subr.mxu0 0.0
    %681 = vmatpush1.msra.mxu0 0.0
    %682 = vmatprep.subr.mxu0 0.0
    %683 = vmatpush1.msra.mxu0 0.0
    %684 = vmatprep.subr.mxu0 0.0
    %685 = vmatpush1.msra.mxu0 0.0
    %686 = vmatprep.subr.mxu0 0.0
    %687 = vmatpush1.msra.mxu0 0.0
    %688 = vmatprep.subr.mxu0 0.0
    %689 = vmatpush1.msra.mxu0 0.0
    %690 = vmatprep.subr.mxu0 0.0
    %691 = vmatpush1.msra.mxu0 0.0
    %692 = vmatprep.subr.mxu0 0.0
    %693 = vmatpush1.msra.mxu0 %v661
    %694 = vmatprep.subr.mxu0 0.0
    %695 = vmatpush2.msra.mxu0 0.0
    %696 = vmatprep.subr.mxu0 0.0
    %697 = vmatpush2.msra.mxu0 0.0
    %698 = vmatprep.subr.mxu0 0.0
    %699 = vmatpush2.msra.mxu0 0.0
    %700 = vmatprep.subr.mxu0 0.0
    %701 = vmatpush2.msra.mxu0 0.0
    %702 = vmatprep.subr.mxu0 0.0
    %703 = vmatpush2.msra.mxu0 0.0
    %704 = vmatprep.subr.mxu0 0.0
    %705 = vmatpush2.msra.mxu0 0.0
    %706 = vmatprep.subr.mxu0 0.0
    %707 = vmatpush2.msra.mxu0 0.0
    %708 = vmatprep.subr.mxu0 0.0
    %709 = vmatpush2.msra.mxu0 0.0
    %710 = vmatprep.subr.mxu0 0.0
    %711 = vmatpush2.msra.mxu0 0.0
    %712 = vmatprep.subr.mxu0 0.0
    %713 = vmatpush2.msra.mxu0 0.0
    %714 = vmatprep.subr.mxu0 0.0
    %715 = vmatpush2.msra.mxu0 0.0
    %716 = vmatprep.subr.mxu0 0.0
    %717 = vmatpush2.msra.mxu0 0.0
    %718 = vmatprep.subr.mxu0 0.0
    %719 = vmatpush2.msra.mxu0 0.0
    %720 = vmatprep.subr.mxu0 0.0
    %721 = vmatpush2.msra.mxu0 0.0
    %722 = vmatprep.subr.mxu0 0.0
    %723 = vmatpush2.msra.mxu0 0.0
    %724 = vmatprep.subr.mxu0 0.0
    %725 = vmatpush2.msra.mxu0 0.0
    %726 = vmatprep.mubr.f32.mxu0 0.0
    %727 = vmatmul.mubr.f32.gmra.mxu0 %v354
    %v728 = vpop.f32.mrf.mxu0
    %v729 = vadd.f32 0.0, %v728
    %v730 = vpop.f32.mrf.mxu0
    %731 = vdwg.mxu0
    %v733 = vsel %vm341, %v729, 0
    %735 = vmatprep.subr.mxu0 0.0
    %736 = vmatpush1.msra.mxu0 0.0
    %737 = vmatprep.subr.mxu0 0.0
    %738 = vmatpush1.msra.mxu0 0.0
    %739 = vmatprep.subr.mxu0 0.0
    %740 = vmatpush1.msra.mxu0 0.0
    %741 = vmatprep.subr.mxu0 0.0
    %742 = vmatpush1.msra.mxu0 0.0
    %743 = vmatprep.subr.mxu0 0.0
    %744 = vmatpush1.msra.mxu0 0.0
    %745 = vmatprep.subr.mxu0 0.0
    %746 = vmatpush1.msra.mxu0 0.0
    %747 = vmatprep.subr.mxu0 0.0
    %748 = vmatpush1.msra.mxu0 0.0
    %749 = vmatprep.subr.mxu0 0.0
    %750 = vmatpush1.msra.mxu0 0.0
    %751 = vmatprep.subr.mxu0 0.0
    %752 = vmatpush1.msra.mxu0 0.0
    %753 = vmatprep.subr.mxu0 0.0
    %754 = vmatpush1.msra.mxu0 0.0
    %755 = vmatprep.subr.mxu0 0.0
    %756 = vmatpush1.msra.mxu0 0.0
    %757 = vmatprep.subr.mxu0 0.0
    %758 = vmatpush1.msra.mxu0 0.0
    %759 = vmatprep.subr.mxu0 0.0
    %760 = vmatpush1.msra.mxu0 0.0
    %761 = vmatprep.subr.mxu0 0.0
    %762 = vmatpush1.msra.mxu0 0.0
    %763 = vmatprep.subr.mxu0 0.0
    %764 = vmatpush1.msra.mxu0 0.0
    %765 = vmatprep.subr.mxu0 0.0
    %766 = vmatpush1.msra.mxu0 %v189
    %767 = vmatprep.subr.mxu0 0.0
    %768 = vmatpush2.msra.mxu0 0.0
    %769 = vmatprep.subr.mxu0 0.0
    %770 = vmatpush2.msra.mxu0 0.0
    %771 = vmatprep.subr.mxu0 0.0
    %772 = vmatpush2.msra.mxu0 0.0
    %773 = vmatprep.subr.mxu0 0.0
    %774 = vmatpush2.msra.mxu0 0.0
    %775 = vmatprep.subr.mxu0 0.0
    %776 = vmatpush2.msra.mxu0 0.0
    %777 = vmatprep.subr.mxu0 0.0
    %778 = vmatpush2.msra.mxu0 0.0
    %779 = vmatprep.subr.mxu0 0.0
    %780 = vmatpush2.msra.mxu0 0.0
    %781 = vmatprep.subr.mxu0 0.0
    %782 = vmatpush2.msra.mxu0 0.0
    %783 = vmatprep.subr.mxu0 0.0
    %784 = vmatpush2.msra.mxu0 0.0
    %785 = vmatprep.subr.mxu0 0.0
    %786 = vmatpush2.msra.mxu0 0.0
    %787 = vmatprep.subr.mxu0 0.0
    %788 = vmatpush2.msra.mxu0 0.0
    %789 = vmatprep.subr.mxu0 0.0
    %790 = vmatpush2.msra.mxu0 0.0
    %791 = vmatprep.subr.mxu0 0.0
    %792 = vmatpush2.msra.mxu0 0.0
    %793 = vmatprep.subr.mxu0 0.0
    %794 = vmatpush2.msra.mxu0 0.0
    %795 = vmatprep.subr.mxu0 0.0
    %796 = vmatpush2.msra.mxu0 0.0
    %797 = vmatprep.subr.mxu0 0.0
    %798 = vmatpush2.msra.mxu0 0.0
    %799 = vmatprep.mubr.f32.mxu0 0.0
    %800 = vmatmul.mubr.f32.gmra.mxu0 %v733
    %v801 = vpop.f32.mrf.mxu0
    %v802 = vadd.f32 0.0, %v801
    %v803 = vpop.f32.mrf.mxu0
    %804 = vdwg.mxu0
    %vm805 = vcmp.gt.f32.partialorder %v802, 0.0
    %v806 = vmin.f32 %v802, 0.0
    %v807 = vmul.f32 %v806, 1.442695
    %v808 = vpow.pop %v807
    %v809 = vsub.f32 %v808, 1.0
    %v810 = vsel %vm805, %v802, %v809
    %v811 = vld [vmem:[%s5] sm:$0xff]
    %v812 = vld [vmem:[%s5 + $0x8] sm:$0xff]
    %v813 = vld [vmem:[%s5 + $0x10] sm:$0xff]
    %v814 = vld [vmem:[%s5 + $0x18] sm:$0xff]
    %v815 = vld [vmem:[%s5 + $0x20] sm:$0xff]
    %v816 = vld [vmem:[%s5 + $0x28] sm:$0xff]
    %v817 = vld [vmem:[%s5 + $0x30] sm:$0xff]
    %v818 = vld [vmem:[%s5 + $0x38] sm:$0xff]
    %v820 = vsel %vm110, %v504, 0
    %v823 = vsel %vm110, %v810, 0
    %825 = vmatprep.subr.mxu0 0.0
    %826 = vmatpush1.msra.mxu0 0.0
    %827 = vmatprep.subr.mxu0 0.0
    %828 = vmatpush1.msra.mxu0 0.0
    %829 = vmatprep.subr.mxu0 0.0
    %830 = vmatpush1.msra.mxu0 0.0
    %831 = vmatprep.subr.mxu0 0.0
    %832 = vmatpush1.msra.mxu0 0.0
    %833 = vmatprep.subr.mxu0 0.0
    %834 = vmatpush1.msra.mxu0 0.0
    %835 = vmatprep.subr.mxu0 0.0
    %836 = vmatpush1.msra.mxu0 0.0
    %837 = vmatprep.subr.mxu0 0.0
    %838 = vmatpush1.msra.mxu0 0.0
    %839 = vmatprep.subr.mxu0 0.0
    %840 = vmatpush1.msra.mxu0 0.0
    %841 = vmatprep.subr.mxu0 0.0
    %842 = vmatpush1.msra.mxu0 %v818
    %843 = vmatprep.subr.mxu0 0.0
    %844 = vmatpush1.msra.mxu0 %v817
    %845 = vmatprep.subr.mxu0 0.0
    %846 = vmatpush1.msra.mxu0 %v816
    %847 = vmatprep.subr.mxu0 0.0
    %848 = vmatpush1.msra.mxu0 %v815
    %849 = vmatprep.subr.mxu0 0.0
    %850 = vmatpush1.msra.mxu0 %v814
    %851 = vmatprep.subr.mxu0 0.0
    %852 = vmatpush1.msra.mxu0 %v813
    %853 = vmatprep.subr.mxu0 0.0
    %854 = vmatpush1.msra.mxu0 %v812
    %855 = vmatprep.subr.mxu0 0.0
    %856 = vmatpush1.msra.mxu0 %v811
    %857 = vmatprep.subr.mxu0 0.0
    %858 = vmatpush2.msra.mxu0 0.0
    %859 = vmatprep.subr.mxu0 0.0
    %860 = vmatpush2.msra.mxu0 0.0
    %861 = vmatprep.subr.mxu0 0.0
    %862 = vmatpush2.msra.mxu0 0.0
    %863 = vmatprep.subr.mxu0 0.0
    %864 = vmatpush2.msra.mxu0 0.0
    %865 = vmatprep.subr.mxu0 0.0
    %866 = vmatpush2.msra.mxu0 0.0
    %867 = vmatprep.subr.mxu0 0.0
    %868 = vmatpush2.msra.mxu0 0.0
    %869 = vmatprep.subr.mxu0 0.0
    %870 = vmatpush2.msra.mxu0 0.0
    %871 = vmatprep.subr.mxu0 0.0
    %872 = vmatpush2.msra.mxu0 0.0
    %873 = vmatprep.subr.mxu0 0.0
    %874 = vmatpush2.msra.mxu0 0.0
    %875 = vmatprep.subr.mxu0 0.0
    %876 = vmatpush2.msra.mxu0 0.0
    %877 = vmatprep.subr.mxu0 0.0
    %878 = vmatpush2.msra.mxu0 0.0
    %879 = vmatprep.subr.mxu0 0.0
    %880 = vmatpush2.msra.mxu0 0.0
    %881 = vmatprep.subr.mxu0 0.0
    %882 = vmatpush2.msra.mxu0 0.0
    %883 = vmatprep.subr.mxu0 0.0
    %884 = vmatpush2.msra.mxu0 0.0
    %885 = vmatprep.subr.mxu0 0.0
    %886 = vmatpush2.msra.mxu0 0.0
    %887 = vmatprep.subr.mxu0 0.0
    %888 = vmatpush2.msra.mxu0 0.0
    %889 = vmatprep.mubr.f32.mxu0 0.0
    %890 = vmatmul.mubr.f32.gmra.mxu0 %v820
    %v891 = vpop.f32.mrf.mxu0
    %v892 = vadd.f32 0.0, %v891
    %v893 = vpop.f32.mrf.mxu0
    %894 = vmatprep.mubr.f32.mxu0 0.0
    %895 = vmatmul.mubr.f32.gmra.mxu0 %v823
    %v896 = vpop.f32.mrf.mxu0
    %v897 = vadd.f32 0.0, %v896
    %v898 = vpop.f32.mrf.mxu0
    %899 = vdwg.mxu0
    %v901 = vsel %vm110, %v98, 0
    %v904 = vsel %vm110, %v892, 0
    %906 = vmatprep.subr.mxu0 0.0
    %907 = vmatpush1.xpose.msra.mxu0 0.0
    %908 = vmatprep.subr.mxu0 0.0
    %909 = vmatpush1.xpose.msra.mxu0 0.0
    %910 = vmatprep.subr.mxu0 0.0
    %911 = vmatpush1.xpose.msra.mxu0 0.0
    %912 = vmatprep.subr.mxu0 0.0
    %913 = vmatpush1.xpose.msra.mxu0 0.0
    %914 = vmatprep.subr.mxu0 0.0
    %915 = vmatpush1.xpose.msra.mxu0 0.0
    %916 = vmatprep.subr.mxu0 0.0
    %917 = vmatpush1.xpose.msra.mxu0 0.0
    %918 = vmatprep.subr.mxu0 0.0
    %919 = vmatpush1.xpose.msra.mxu0 0.0
    %920 = vmatprep.subr.mxu0 0.0
    %921 = vmatpush1.xpose.msra.mxu0 0.0
    %922 = vmatprep.subr.mxu0 0.0
    %923 = vmatpush1.xpose.msra.mxu0 0.0
    %924 = vmatprep.subr.mxu0 0.0
    %925 = vmatpush1.xpose.msra.mxu0 0.0
    %926 = vmatprep.subr.mxu0 0.0
    %927 = vmatpush1.xpose.msra.mxu0 0.0
    %928 = vmatprep.subr.mxu0 0.0
    %929 = vmatpush1.xpose.msra.mxu0 0.0
    %930 = vmatprep.subr.mxu0 0.0
    %931 = vmatpush1.xpose.msra.mxu0 0.0
    %932 = vmatprep.subr.mxu0 0.0
    %933 = vmatpush1.xpose.msra.mxu0 0.0
    %934 = vmatprep.subr.mxu0 0.0
    %935 = vmatpush1.xpose.msra.mxu0 0.0
    %936 = vmatprep.subr.mxu0 0.0
    %937 = vmatpush1.xpose.msra.mxu0 %v904
    %938 = vmatprep.subr.mxu0 0.0
    %939 = vmatpush2.xpose.msra.mxu0 0.0
    %940 = vmatprep.subr.mxu0 0.0
    %941 = vmatpush2.xpose.msra.mxu0 0.0
    %942 = vmatprep.subr.mxu0 0.0
    %943 = vmatpush2.xpose.msra.mxu0 0.0
    %944 = vmatprep.subr.mxu0 0.0
    %945 = vmatpush2.xpose.msra.mxu0 0.0
    %946 = vmatprep.subr.mxu0 0.0
    %947 = vmatpush2.xpose.msra.mxu0 0.0
    %948 = vmatprep.subr.mxu0 0.0
    %949 = vmatpush2.xpose.msra.mxu0 0.0
    %950 = vmatprep.subr.mxu0 0.0
    %951 = vmatpush2.xpose.msra.mxu0 0.0
    %952 = vmatprep.subr.mxu0 0.0
    %953 = vmatpush2.xpose.msra.mxu0 0.0
    %954 = vmatprep.subr.mxu0 0.0
    %955 = vmatpush2.xpose.msra.mxu0 0.0
    %956 = vmatprep.subr.mxu0 0.0
    %957 = vmatpush2.xpose.msra.mxu0 0.0
    %958 = vmatprep.subr.mxu0 0.0
    %959 = vmatpush2.xpose.msra.mxu0 0.0
    %960 = vmatprep.subr.mxu0 0.0
    %961 = vmatpush2.xpose.msra.mxu0 0.0
    %962 = vmatprep.subr.mxu0 0.0
    %963 = vmatpush2.xpose.msra.mxu0 0.0
    %964 = vmatprep.subr.mxu0 0.0
    %965 = vmatpush2.xpose.msra.mxu0 0.0
    %966 = vmatprep.subr.mxu0 0.0
    %967 = vmatpush2.xpose.msra.mxu0 0.0
    %968 = vmatprep.subr.mxu0 0.0
    %969 = vmatpush2.xpose.msra.mxu0 0.0
    %970 = vmatprep.mubr.f32.mxu0 0.0
    %971 = vmatmul.mubr.f32.gmra.mxu0 %v901
    %v972 = vpop.f32.mrf.mxu0
    %v973 = vadd.f32 0.0, %v972
    %v974 = vpop.f32.mrf.mxu0
    %975 = vdwg.mxu0
    %976 = vmatprep.subr.mxu0 0.0
    %977 = vmatpush1.msra.mxu0 0.0
    %978 = vmatprep.subr.mxu0 0.0
    %979 = vmatpush1.msra.mxu0 0.0
    %980 = vmatprep.subr.mxu0 0.0
    %981 = vmatpush1.msra.mxu0 0.0
    %982 = vmatprep.subr.mxu0 0.0
    %983 = vmatpush1.msra.mxu0 0.0
    %984 = vmatprep.subr.mxu0 0.0
    %985 = vmatpush1.msra.mxu0 0.0
    %986 = vmatprep.subr.mxu0 0.0
    %987 = vmatpush1.msra.mxu0 0.0
    %988 = vmatprep.subr.mxu0 0.0
    %989 = vmatpush1.msra.mxu0 0.0
    %990 = vmatprep.subr.mxu0 0.0
    %991 = vmatpush1.msra.mxu0 0.0
    %992 = vmatprep.subr.mxu0 0.0
    %993 = vmatpush1.msra.mxu0 %v97
    %994 = vmatprep.subr.mxu0 0.0
    %995 = vmatpush1.msra.mxu0 %v96
    %996 = vmatprep.subr.mxu0 0.0
    %997 = vmatpush1.msra.mxu0 %v95
    %998 = vmatprep.subr.mxu0 0.0
    %999 = vmatpush1.msra.mxu0 %v94
    %1000 = vmatprep.subr.mxu0 0.0
    %1001 = vmatpush1.msra.mxu0 %v93
    %1002 = vmatprep.subr.mxu0 0.0
    %1003 = vmatpush1.msra.mxu0 %v92
    %1004 = vmatprep.subr.mxu0 0.0
    %1005 = vmatpush1.msra.mxu0 %v91
    %1006 = vmatprep.subr.mxu0 0.0
    %1007 = vmatpush1.msra.mxu0 %v90
    %1008 = vmatprep.subr.mxu0 0.0
    %1009 = vmatpush2.msra.mxu0 0.0
    %1010 = vmatprep.subr.mxu0 0.0
    %1011 = vmatpush2.msra.mxu0 0.0
    %1012 = vmatprep.subr.mxu0 0.0
    %1013 = vmatpush2.msra.mxu0 0.0
    %1014 = vmatprep.subr.mxu0 0.0
    %1015 = vmatpush2.msra.mxu0 0.0
    %1016 = vmatprep.subr.mxu0 0.0
    %1017 = vmatpush2.msra.mxu0 0.0
    %1018 = vmatprep.subr.mxu0 0.0
    %1019 = vmatpush2.msra.mxu0 0.0
    %1020 = vmatprep.subr.mxu0 0.0
    %1021 = vmatpush2.msra.mxu0 0.0
    %1022 = vmatprep.subr.mxu0 0.0
    %1023 = vmatpush2.msra.mxu0 0.0
    %1024 = vmatprep.subr.mxu0 0.0
    %1025 = vmatpush2.msra.mxu0 0.0
    %1026 = vmatprep.subr.mxu0 0.0
    %1027 = vmatpush2.msra.mxu0 0.0
    %1028 = vmatprep.subr.mxu0 0.0
    %1029 = vmatpush2.msra.mxu0 0.0
    %1030 = vmatprep.subr.mxu0 0.0
    %1031 = vmatpush2.msra.mxu0 0.0
    %1032 = vmatprep.subr.mxu0 0.0
    %1033 = vmatpush2.msra.mxu0 0.0
    %1034 = vmatprep.subr.mxu0 0.0
    %1035 = vmatpush2.msra.mxu0 0.0
    %1036 = vmatprep.subr.mxu0 0.0
    %1037 = vmatpush2.msra.mxu0 0.0
    %1038 = vmatprep.subr.mxu0 0.0
    %1039 = vmatpush2.msra.mxu0 0.0
    %1040 = vmatprep.mubr.f32.mxu0 0.0
    %1041 = vmatmul.mubr.f32.gmra.mxu0 %v904
    %v1042 = vpop.f32.mrf.mxu0
    %v1043 = vadd.f32 %v973, %v1042
    %v1044 = vpop.f32.mrf.mxu0
    %1045 = vdwg.mxu0
    %vm1046 = vcmp.gt.f32.partialorder %v1043, 0.0
    %v1047 = vmul.f32 %v1043, 0.2
    %v1048 = vsel %vm1046, %v1043, %v1047
    %v1049 = vsel %vm341, %v1048, -inf
    %1050 = vmax.xlane.f32.xlu0 %v1049
    %v1051 = vpop.xlane.xlu0 %1050
    %v1052 = vsub.f32 %v1048, %v1051
    %v1053 = vmul.f32 %v1052, 1.442695
    %v1054 = vpow.pop %v1053
    %v1055 = vsel %vm341, %v1054, 0.0
    %1056 = vadd.xlane.f32.xlu0 %v1055
    %v1057 = vpop.xlane.xlu0 %1056
    %v1058 = vrcp.pop %v1057
    %v1059 = vmul.f32 %v1054, %v1058
    %v1061 = vsel %vm341, %v99, 0
    %1063 = vmatprep.subr.mxu0 0.0
    %1064 = vmatpush1.msra.mxu0 0.0
    %1065 = vmatprep.subr.mxu0 0.0
    %1066 = vmatpush1.msra.mxu0 0.0
    %1067 = vmatprep.subr.mxu0 0.0
    %1068 = vmatpush1.msra.mxu0 0.0
    %1069 = vmatprep.subr.mxu0 0.0
    %1070 = vmatpush1.msra.mxu0 0.0
    %1071 = vmatprep.subr.mxu0 0.0
    %1072 = vmatpush1.msra.mxu0 0.0
    %1073 = vmatprep.subr.mxu0 0.0
    %1074 = vmatpush1.msra.mxu0 0.0
    %1075 = vmatprep.subr.mxu0 0.0
    %1076 = vmatpush1.msra.mxu0 0.0
    %1077 = vmatprep.subr.mxu0 0.0
    %1078 = vmatpush1.msra.mxu0 0.0
    %1079 = vmatprep.subr.mxu0 0.0
    %1080 = vmatpush1.msra.mxu0 0.0
    %1081 = vmatprep.subr.mxu0 0.0
    %1082 = vmatpush1.msra.mxu0 0.0
    %1083 = vmatprep.subr.mxu0 0.0
    %1084 = vmatpush1.msra.mxu0 0.0
    %1085 = vmatprep.subr.mxu0 0.0
    %1086 = vmatpush1.msra.mxu0 0.0
    %1087 = vmatprep.subr.mxu0 0.0
    %1088 = vmatpush1.msra.mxu0 0.0
    %1089 = vmatprep.subr.mxu0 0.0
    %1090 = vmatpush1.msra.mxu0 0.0
    %1091 = vmatprep.subr.mxu0 0.0
    %1092 = vmatpush1.msra.mxu0 0.0
    %1093 = vmatprep.subr.mxu0 0.0
    %1094 = vmatpush1.msra.mxu0 %v1059
    %1095 = vmatprep.subr.mxu0 0.0
    %1096 = vmatpush2.msra.mxu0 0.0
    %1097 = vmatprep.subr.mxu0 0.0
    %1098 = vmatpush2.msra.mxu0 0.0
    %1099 = vmatprep.subr.mxu0 0.0
    %1100 = vmatpush2.msra.mxu0 0.0
    %1101 = vmatprep.subr.mxu0 0.0
    %1102 = vmatpush2.msra.mxu0 0.0
    %1103 = vmatprep.subr.mxu0 0.0
    %1104 = vmatpush2.msra.mxu0 0.0
    %1105 = vmatprep.subr.mxu0 0.0
    %1106 = vmatpush2.msra.mxu0 0.0
    %1107 = vmatprep.subr.mxu0 0.0
    %1108 = vmatpush2.msra.mxu0 0.0
    %1109 = vmatprep.subr.mxu0 0.0
    %1110 = vmatpush2.msra.mxu0 0.0
    %1111 = vmatprep.subr.mxu0 0.0
    %1112 = vmatpush2.msra.mxu0 0.0
    %1113 = vmatprep.subr.mxu0 0.0
    %1114 = vmatpush2.msra.mxu0 0.0
    %1115 = vmatprep.subr.mxu0 0.0
    %1116 = vmatpush2.msra.mxu0 0.0
    %1117 = vmatprep.subr.mxu0 0.0
    %1118 = vmatpush2.msra.mxu0 0.0
    %1119 = vmatprep.subr.mxu0 0.0
    %1120 = vmatpush2.msra.mxu0 0.0
    %1121 = vmatprep.subr.mxu0 0.0
    %1122 = vmatpush2.msra.mxu0 0.0
    %1123 = vmatprep.subr.mxu0 0.0
    %1124 = vmatpush2.msra.mxu0 0.0
    %1125 = vmatprep.subr.mxu0 0.0
    %1126 = vmatpush2.msra.mxu0 0.0
    %1127 = vmatprep.mubr.f32.mxu0 0.0
    %1128 = vmatmul.mubr.f32.gmra.mxu0 %v1061
    %v1129 = vpop.f32.mrf.mxu0
    %v1130 = vadd.f32 0.0, %v1129
    %v1131 = vpop.f32.mrf.mxu0
    %1132 = vdwg.mxu0
    %v1134 = vsel %vm341, %v1130, 0
    %1136 = vmatprep.subr.mxu0 0.0
    %1137 = vmatpush1.msra.mxu0 0.0
    %1138 = vmatprep.subr.mxu0 0.0
    %1139 = vmatpush1.msra.mxu0 0.0
    %1140 = vmatprep.subr.mxu0 0.0
    %1141 = vmatpush1.msra.mxu0 0.0
    %1142 = vmatprep.subr.mxu0 0.0
    %1143 = vmatpush1.msra.mxu0 0.0
    %1144 = vmatprep.subr.mxu0 0.0
    %1145 = vmatpush1.msra.mxu0 0.0
    %1146 = vmatprep.subr.mxu0 0.0
    %1147 = vmatpush1.msra.mxu0 0.0
    %1148 = vmatprep.subr.mxu0 0.0
    %1149 = vmatpush1.msra.mxu0 0.0
    %1150 = vmatprep.subr.mxu0 0.0
    %1151 = vmatpush1.msra.mxu0 0.0
    %1152 = vmatprep.subr.mxu0 0.0
    %1153 = vmatpush1.msra.mxu0 0.0
    %1154 = vmatprep.subr.mxu0 0.0
    %1155 = vmatpush1.msra.mxu0 0.0
    %1156 = vmatprep.subr.mxu0 0.0
    %1157 = vmatpush1.msra.mxu0 0.0
    %1158 = vmatprep.subr.mxu0 0.0
    %1159 = vmatpush1.msra.mxu0 0.0
    %1160 = vmatprep.subr.mxu0 0.0
    %1161 = vmatpush1.msra.mxu0 0.0
    %1162 = vmatprep.subr.mxu0 0.0
    %1163 = vmatpush1.msra.mxu0 0.0
    %1164 = vmatprep.subr.mxu0 0.0
    %1165 = vmatpush1.msra.mxu0 0.0
    %1166 = vmatprep.subr.mxu0 0.0
    %1167 = vmatpush1.msra.mxu0 %v892
    %1168 = vmatprep.subr.mxu0 0.0
    %1169 = vmatpush2.msra.mxu0 0.0
    %1170 = vmatprep.subr.mxu0 0.0
    %1171 = vmatpush2.msra.mxu0 0.0
    %1172 = vmatprep.subr.mxu0 0.0
    %1173 = vmatpush2.msra.mxu0 0.0
    %1174 = vmatprep.subr.mxu0 0.0
    %1175 = vmatpush2.msra.mxu0 0.0
    %1176 = vmatprep.subr.mxu0 0.0
    %1177 = vmatpush2.msra.mxu0 0.0
    %1178 = vmatprep.subr.mxu0 0.0
    %1179 = vmatpush2.msra.mxu0 0.0
    %1180 = vmatprep.subr.mxu0 0.0
    %1181 = vmatpush2.msra.mxu0 0.0
    %1182 = vmatprep.subr.mxu0 0.0
    %1183 = vmatpush2.msra.mxu0 0.0
    %1184 = vmatprep.subr.mxu0 0.0
    %1185 = vmatpush2.msra.mxu0 0.0
    %1186 = vmatprep.subr.mxu0 0.0
    %1187 = vmatpush2.msra.mxu0 0.0
    %1188 = vmatprep.subr.mxu0 0.0
    %1189 = vmatpush2.msra.mxu0 0.0
    %1190 = vmatprep.subr.mxu0 0.0
    %1191 = vmatpush2.msra.mxu0 0.0
    %1192 = vmatprep.subr.mxu0 0.0
    %1193 = vmatpush2.msra.mxu0 0.0
    %1194 = vmatprep.subr.mxu0 0.0
    %1195 = vmatpush2.msra.mxu0 0.0
    %1196 = vmatprep.subr.mxu0 0.0
    %1197 = vmatpush2.msra.mxu0 0.0
    %1198 = vmatprep.subr.mxu0 0.0
    %1199 = vmatpush2.msra.mxu0 0.0
    %1200 = vmatprep.mubr.f32.mxu0 0.0
    %1201 = vmatmul.mubr.f32.gmra.mxu0 %v1134
    %v1202 = vpop.f32.mrf.mxu0
    %v1203 = vadd.f32 0.0, %v1202
    %v1204 = vpop.f32.mrf.mxu0
    %1205 = vdwg.mxu0
    %vm1206 = vcmp.gt.f32.partialorder %v1203, 0.0
    %v1207 = vmin.f32 %v1203, 0.0
    %v1208 = vmul.f32 %v1207, 1.442695
    %v1209 = vpow.pop %v1208
    %v1210 = vsub.f32 %v1209, 1.0
    %v1211 = vsel %vm1206, %v1203, %v1210
    %v1212 = vtanh.pop %v1211
    %1213 = vst.msk [vmem:[#allocation10] sm:$0xff] %vm110, %v1212
    %v1215 = vsel %vm110, %v897, 0
    %1217 = vmatprep.subr.mxu0 0.0
    %1218 = vmatpush1.xpose.msra.mxu0 0.0
    %1219 = vmatprep.subr.mxu0 0.0
    %1220 = vmatpush1.xpose.msra.mxu0 0.0
    %1221 = vmatprep.subr.mxu0 0.0
    %1222 = vmatpush1.xpose.msra.mxu0 0.0
    %1223 = vmatprep.subr.mxu0 0.0
    %1224 = vmatpush1.xpose.msra.mxu0 0.0
    %1225 = vmatprep.subr.mxu0 0.0
    %1226 = vmatpush1.xpose.msra.mxu0 0.0
    %1227 = vmatprep.subr.mxu0 0.0
    %1228 = vmatpush1.xpose.msra.mxu0 0.0
    %1229 = vmatprep.subr.mxu0 0.0
    %1230 = vmatpush1.xpose.msra.mxu0 0.0
    %1231 = vmatprep.subr.mxu0 0.0
    %1232 = vmatpush1.xpose.msra.mxu0 0.0
    %1233 = vmatprep.subr.mxu0 0.0
    %1234 = vmatpush1.xpose.msra.mxu0 0.0
    %1235 = vmatprep.subr.mxu0 0.0
    %1236 = vmatpush1.xpose.msra.mxu0 0.0
    %1237 = vmatprep.subr.mxu0 0.0
    %1238 = vmatpush1.xpose.msra.mxu0 0.0
    %1239 = vmatprep.subr.mxu0 0.0
    %1240 = vmatpush1.xpose.msra.mxu0 0.0
    %1241 = vmatprep.subr.mxu0 0.0
    %1242 = vmatpush1.xpose.msra.mxu0 0.0
    %1243 = vmatprep.subr.mxu0 0.0
    %1244 = vmatpush1.xpose.msra.mxu0 0.0
    %1245 = vmatprep.subr.mxu0 0.0
    %1246 = vmatpush1.xpose.msra.mxu0 0.0
    %1247 = vmatprep.subr.mxu0 0.0
    %1248 = vmatpush1.xpose.msra.mxu0 %v1215
    %1249 = vmatprep.subr.mxu0 0.0
    %1250 = vmatpush2.xpose.msra.mxu0 0.0
    %1251 = vmatprep.subr.mxu0 0.0
    %1252 = vmatpush2.xpose.msra.mxu0 0.0
    %1253 = vmatprep.subr.mxu0 0.0
    %1254 = vmatpush2.xpose.msra.mxu0 0.0
    %1255 = vmatprep.subr.mxu0 0.0
    %1256 = vmatpush2.xpose.msra.mxu0 0.0
    %1257 = vmatprep.subr.mxu0 0.0
    %1258 = vmatpush2.xpose.msra.mxu0 0.0
    %1259 = vmatprep.subr.mxu0 0.0
    %1260 = vmatpush2.xpose.msra.mxu0 0.0
    %1261 = vmatprep.subr.mxu0 0.0
    %1262 = vmatpush2.xpose.msra.mxu0 0.0
    %1263 = vmatprep.subr.mxu0 0.0
    %1264 = vmatpush2.xpose.msra.mxu0 0.0
    %1265 = vmatprep.subr.mxu0 0.0
    %1266 = vmatpush2.xpose.msra.mxu0 0.0
    %1267 = vmatprep.subr.mxu0 0.0
    %1268 = vmatpush2.xpose.msra.mxu0 0.0
    %1269 = vmatprep.subr.mxu0 0.0
    %1270 = vmatpush2.xpose.msra.mxu0 0.0
    %1271 = vmatprep.subr.mxu0 0.0
    %1272 = vmatpush2.xpose.msra.mxu0 0.0
    %1273 = vmatprep.subr.mxu0 0.0
    %1274 = vmatpush2.xpose.msra.mxu0 0.0
    %1275 = vmatprep.subr.mxu0 0.0
    %1276 = vmatpush2.xpose.msra.mxu0 0.0
    %1277 = vmatprep.subr.mxu0 0.0
    %1278 = vmatpush2.xpose.msra.mxu0 0.0
    %1279 = vmatprep.subr.mxu0 0.0
    %1280 = vmatpush2.xpose.msra.mxu0 0.0
    %1281 = vmatprep.mubr.f32.mxu0 0.0
    %1282 = vmatmul.mubr.f32.gmra.mxu0 %v901
    %v1283 = vpop.f32.mrf.mxu0
    %v1284 = vadd.f32 0.0, %v1283
    %v1285 = vpop.f32.mrf.mxu0
    %1286 = vdwg.mxu0
    %1287 = vmatprep.subr.mxu0 0.0
    %1288 = vmatpush1.msra.mxu0 0.0
    %1289 = vmatprep.subr.mxu0 0.0
    %1290 = vmatpush1.msra.mxu0 0.0
    %1291 = vmatprep.subr.mxu0 0.0
    %1292 = vmatpush1.msra.mxu0 0.0
    %1293 = vmatprep.subr.mxu0 0.0
    %1294 = vmatpush1.msra.mxu0 0.0
    %1295 = vmatprep.subr.mxu0 0.0
    %1296 = vmatpush1.msra.mxu0 0.0
    %1297 = vmatprep.subr.mxu0 0.0
    %1298 = vmatpush1.msra.mxu0 0.0
    %1299 = vmatprep.subr.mxu0 0.0
    %1300 = vmatpush1.msra.mxu0 0.0
    %1301 = vmatprep.subr.mxu0 0.0
    %1302 = vmatpush1.msra.mxu0 0.0
    %1303 = vmatprep.subr.mxu0 0.0
    %1304 = vmatpush1.msra.mxu0 %v97
    %1305 = vmatprep.subr.mxu0 0.0
    %1306 = vmatpush1.msra.mxu0 %v96
    %1307 = vmatprep.subr.mxu0 0.0
    %1308 = vmatpush1.msra.mxu0 %v95
    %1309 = vmatprep.subr.mxu0 0.0
    %1310 = vmatpush1.msra.mxu0 %v94
    %1311 = vmatprep.subr.mxu0 0.0
    %1312 = vmatpush1.msra.mxu0 %v93
    %1313 = vmatprep.subr.mxu0 0.0
    %1314 = vmatpush1.msra.mxu0 %v92
    %1315 = vmatprep.subr.mxu0 0.0
    %1316 = vmatpush1.msra.mxu0 %v91
    %1317 = vmatprep.subr.mxu0 0.0
    %1318 = vmatpush1.msra.mxu0 %v90
    %1319 = vmatprep.subr.mxu0 0.0
    %1320 = vmatpush2.msra.mxu0 0.0
    %1321 = vmatprep.subr.mxu0 0.0
    %1322 = vmatpush2.msra.mxu0 0.0
    %1323 = vmatprep.subr.mxu0 0.0
    %1324 = vmatpush2.msra.mxu0 0.0
    %1325 = vmatprep.subr.mxu0 0.0
    %1326 = vmatpush2.msra.mxu0 0.0
    %1327 = vmatprep.subr.mxu0 0.0
    %1328 = vmatpush2.msra.mxu0 0.0
    %1329 = vmatprep.subr.mxu0 0.0
    %1330 = vmatpush2.msra.mxu0 0.0
    %1331 = vmatprep.subr.mxu0 0.0
    %1332 = vmatpush2.msra.mxu0 0.0
    %1333 = vmatprep.subr.mxu0 0.0
    %1334 = vmatpush2.msra.mxu0 0.0
    %1335 = vmatprep.subr.mxu0 0.0
    %1336 = vmatpush2.msra.mxu0 0.0
    %1337 = vmatprep.subr.mxu0 0.0
    %1338 = vmatpush2.msra.mxu0 0.0
    %1339 = vmatprep.subr.mxu0 0.0
    %1340 = vmatpush2.msra.mxu0 0.0
    %1341 = vmatprep.subr.mxu0 0.0
    %1342 = vmatpush2.msra.mxu0 0.0
    %1343 = vmatprep.subr.mxu0 0.0
    %1344 = vmatpush2.msra.mxu0 0.0
    %1345 = vmatprep.subr.mxu0 0.0
    %1346 = vmatpush2.msra.mxu0 0.0
    %1347 = vmatprep.subr.mxu0 0.0
    %1348 = vmatpush2.msra.mxu0 0.0
    %1349 = vmatprep.subr.mxu0 0.0
    %1350 = vmatpush2.msra.mxu0 0.0
    %1351 = vmatprep.mubr.f32.mxu0 0.0
    %1352 = vmatmul.mubr.f32.gmra.mxu0 %v1215
    %v1353 = vpop.f32.mrf.mxu0
    %v1354 = vadd.f32 %v1284, %v1353
    %v1355 = vpop.f32.mrf.mxu0
    %1356 = vdwg.mxu0
    %vm1357 = vcmp.gt.f32.partialorder %v1354, 0.0
    %v1358 = vmul.f32 %v1354, 0.2
    %v1359 = vsel %vm1357, %v1354, %v1358
    %v1360 = vsel %vm341, %v1359, -inf
    %1361 = vmax.xlane.f32.xlu0 %v1360
    %v1362 = vpop.xlane.xlu0 %1361
    %v1363 = vsub.f32 %v1359, %v1362
    %v1364 = vmul.f32 %v1363, 1.442695
    %v1365 = vpow.pop %v1364
    %v1366 = vsel %vm341, %v1365, 0.0
    %1367 = vadd.xlane.f32.xlu0 %v1366
    %v1368 = vpop.xlane.xlu0 %1367
    %v1369 = vrcp.pop %v1368
    %v1370 = vmul.f32 %v1365, %v1369
    %1371 = vmatprep.subr.mxu0 0.0
    %1372 = vmatpush1.msra.mxu0 0.0
    %1373 = vmatprep.subr.mxu0 0.0
    %1374 = vmatpush1.msra.mxu0 0.0
    %1375 = vmatprep.subr.mxu0 0.0
    %1376 = vmatpush1.msra.mxu0 0.0
    %1377 = vmatprep.subr.mxu0 0.0
    %1378 = vmatpush1.msra.mxu0 0.0
    %1379 = vmatprep.subr.mxu0 0.0
    %1380 = vmatpush1.msra.mxu0 0.0
    %1381 = vmatprep.subr.mxu0 0.0
    %1382 = vmatpush1.msra.mxu0 0.0
    %1383 = vmatprep.subr.mxu0 0.0
    %1384 = vmatpush1.msra.mxu0 0.0
    %1385 = vmatprep.subr.mxu0 0.0
    %1386 = vmatpush1.msra.mxu0 0.0
    %1387 = vmatprep.subr.mxu0 0.0
    %1388 = vmatpush1.msra.mxu0 0.0
    %1389 = vmatprep.subr.mxu0 0.0
    %1390 = vmatpush1.msra.mxu0 0.0
    %1391 = vmatprep.subr.mxu0 0.0
    %1392 = vmatpush1.msra.mxu0 0.0
    %1393 = vmatprep.subr.mxu0 0.0
    %1394 = vmatpush1.msra.mxu0 0.0
    %1395 = vmatprep.subr.mxu0 0.0
    %1396 = vmatpush1.msra.mxu0 0.0
    %1397 = vmatprep.subr.mxu0 0.0
    %1398 = vmatpush1.msra.mxu0 0.0
    %1399 = vmatprep.subr.mxu0 0.0
    %1400 = vmatpush1.msra.mxu0 0.0
    %1401 = vmatprep.subr.mxu0 0.0
    %1402 = vmatpush1.msra.mxu0 %v1370
    %1403 = vmatprep.subr.mxu0 0.0
    %1404 = vmatpush2.msra.mxu0 0.0
    %1405 = vmatprep.subr.mxu0 0.0
    %1406 = vmatpush2.msra.mxu0 0.0
    %1407 = vmatprep.subr.mxu0 0.0
    %1408 = vmatpush2.msra.mxu0 0.0
    %1409 = vmatprep.subr.mxu0 0.0
    %1410 = vmatpush2.msra.mxu0 0.0
    %1411 = vmatprep.subr.mxu0 0.0
    %1412 = vmatpush2.msra.mxu0 0.0
    %1413 = vmatprep.subr.mxu0 0.0
    %1414 = vmatpush2.msra.mxu0 0.0
    %1415 = vmatprep.subr.mxu0 0.0
    %1416 = vmatpush2.msra.mxu0 0.0
    %1417 = vmatprep.subr.mxu0 0.0
    %1418 = vmatpush2.msra.mxu0 0.0
    %1419 = vmatprep.subr.mxu0 0.0
    %1420 = vmatpush2.msra.mxu0 0.0
    %1421 = vmatprep.subr.mxu0 0.0
    %1422 = vmatpush2.msra.mxu0 0.0
    %1423 = vmatprep.subr.mxu0 0.0
    %1424 = vmatpush2.msra.mxu0 0.0
    %1425 = vmatprep.subr.mxu0 0.0
    %1426 = vmatpush2.msra.mxu0 0.0
    %1427 = vmatprep.subr.mxu0 0.0
    %1428 = vmatpush2.msra.mxu0 0.0
    %1429 = vmatprep.subr.mxu0 0.0
    %1430 = vmatpush2.msra.mxu0 0.0
    %1431 = vmatprep.subr.mxu0 0.0
    %1432 = vmatpush2.msra.mxu0 0.0
    %1433 = vmatprep.subr.mxu0 0.0
    %1434 = vmatpush2.msra.mxu0 0.0
    %1435 = vmatprep.mubr.f32.mxu0 0.0
    %1436 = vmatmul.mubr.f32.gmra.mxu0 %v1061
    %v1437 = vpop.f32.mrf.mxu0
    %v1438 = vadd.f32 0.0, %v1437
    %v1439 = vpop.f32.mrf.mxu0
    %1440 = vdwg.mxu0
    %v1442 = vsel %vm341, %v1438, 0
    %1444 = vmatprep.subr.mxu0 0.0
    %1445 = vmatpush1.msra.mxu0 0.0
    %1446 = vmatprep.subr.mxu0 0.0
    %1447 = vmatpush1.msra.mxu0 0.0
    %1448 = vmatprep.subr.mxu0 0.0
    %1449 = vmatpush1.msra.mxu0 0.0
    %1450 = vmatprep.subr.mxu0 0.0
    %1451 = vmatpush1.msra.mxu0 0.0
    %1452 = vmatprep.subr.mxu0 0.0
    %1453 = vmatpush1.msra.mxu0 0.0
    %1454 = vmatprep.subr.mxu0 0.0
    %1455 = vmatpush1.msra.mxu0 0.0
    %1456 = vmatprep.subr.mxu0 0.0
    %1457 = vmatpush1.msra.mxu0 0.0
    %1458 = vmatprep.subr.mxu0 0.0
    %1459 = vmatpush1.msra.mxu0 0.0
    %1460 = vmatprep.subr.mxu0 0.0
    %1461 = vmatpush1.msra.mxu0 0.0
    %1462 = vmatprep.subr.mxu0 0.0
    %1463 = vmatpush1.msra.mxu0 0.0
    %1464 = vmatprep.subr.mxu0 0.0
    %1465 = vmatpush1.msra.mxu0 0.0
    %1466 = vmatprep.subr.mxu0 0.0
    %1467 = vmatpush1.msra.mxu0 0.0
    %1468 = vmatprep.subr.mxu0 0.0
    %1469 = vmatpush1.msra.mxu0 0.0
    %1470 = vmatprep.subr.mxu0 0.0
    %1471 = vmatpush1.msra.mxu0 0.0
    %1472 = vmatprep.subr.mxu0 0.0
    %1473 = vmatpush1.msra.mxu0 0.0
    %1474 = vmatprep.subr.mxu0 0.0
    %1475 = vmatpush1.msra.mxu0 %v897
    %1476 = vmatprep.subr.mxu0 0.0
    %1477 = vmatpush2.msra.mxu0 0.0
    %1478 = vmatprep.subr.mxu0 0.0
    %1479 = vmatpush2.msra.mxu0 0.0
    %1480 = vmatprep.subr.mxu0 0.0
    %1481 = vmatpush2.msra.mxu0 0.0
    %1482 = vmatprep.subr.mxu0 0.0
    %1483 = vmatpush2.msra.mxu0 0.0
    %1484 = vmatprep.subr.mxu0 0.0
    %1485 = vmatpush2.msra.mxu0 0.0
    %1486 = vmatprep.subr.mxu0 0.0
    %1487 = vmatpush2.msra.mxu0 0.0
    %1488 = vmatprep.subr.mxu0 0.0
    %1489 = vmatpush2.msra.mxu0 0.0
    %1490 = vmatprep.subr.mxu0 0.0
    %1491 = vmatpush2.msra.mxu0 0.0
    %1492 = vmatprep.subr.mxu0 0.0
    %1493 = vmatpush2.msra.mxu0 0.0
    %1494 = vmatprep.subr.mxu0 0.0
    %1495 = vmatpush2.msra.mxu0 0.0
    %1496 = vmatprep.subr.mxu0 0.0
    %1497 = vmatpush2.msra.mxu0 0.0
    %1498 = vmatprep.subr.mxu0 0.0
    %1499 = vmatpush2.msra.mxu0 0.0
    %1500 = vmatprep.subr.mxu0 0.0
    %1501 = vmatpush2.msra.mxu0 0.0
    %1502 = vmatprep.subr.mxu0 0.0
    %1503 = vmatpush2.msra.mxu0 0.0
    %1504 = vmatprep.subr.mxu0 0.0
    %1505 = vmatpush2.msra.mxu0 0.0
    %1506 = vmatprep.subr.mxu0 0.0
    %1507 = vmatpush2.msra.mxu0 0.0
    %1508 = vmatprep.mubr.f32.mxu0 0.0
    %1509 = vmatmul.mubr.f32.gmra.mxu0 %v1442
    %v1510 = vpop.f32.mrf.mxu0
    %v1511 = vadd.f32 0.0, %v1510
    %v1512 = vpop.f32.mrf.mxu0
    %1513 = vdwg.mxu0
    %vm1514 = vcmp.gt.f32.partialorder %v1511, 0.0
    %v1515 = vmin.f32 %v1511, 0.0
    %v1516 = vmul.f32 %v1515, 1.442695
    %v1517 = vpow.pop %v1516
    %v1518 = vsub.f32 %v1517, 1.0
    %v1519 = vsel %vm1514, %v1511, %v1518
    %v1520 = vtanh.pop %v1519
    %1521 = vst.msk [vmem:[#allocation10 + $0x8] sm:$0xff] %vm110, %v1520
    // Predicated region
    $region54: #{tpu_custom_call.1} parent=1 // pred_check
      _
    $region55: #{tpu_custom_call.1} parent=1 // pred_check_branch
      %1523 = sbr.rel (0) target = $region57
    $region56: #{tpu_custom_call.1} parent=1 // pred_region
      %s1525 = ssub.s32 256, 256
      %1526 = vsyncadd [#allocation4], %s1525
      %s1527 = sshll.u32 [#allocation10], 4
      %s1528 = int_to_ptr.vmem [resolvable:$true] %s1527
      %1533 = dma.vmem_to_hbm [thread:$0]  %s1528, 256, %s9, [#allocation4], 128, 128, 8
    $region57: #{tpu_custom_call.1} parent=1 // pred_fallthru
      _
    // Predicated region
    $region58: #{tpu_custom_call.1} parent=1 // pred_check
      _
    $region59: #{tpu_custom_call.1} parent=1 // pred_check_branch
      %1535 = sbr.rel (0) target = $region61
    $region60: #{tpu_custom_call.1} parent=1 // pred_region
      %1536 = dma.done [#allocation4], 256
    $region61: #{tpu_custom_call.1} parent=1 // pred_fallthru
      _
    %1537 = vsyncpa [#allocation3], 1
    %1538 = vsyncpa [#allocation6], 1
    %1539 = vsyncpa [#allocation9], 1
    %1540 = vsyncpa [#allocation4], 1

</llo_original>
